<compile_context>
chip_gen: v7x
topology: tpu7x:2x2x1
jax: 0.10.0
libtpu: 0.0.40
codegen_flags: <defaults>
</compile_context>

<pallas_src>
import functools

import jax
import jax.numpy as jnp
from jax.experimental import pallas as pl
from jax.experimental.pallas import tpu as pltpu


def _elu_f32(y):
    # ELU(alpha=1) in f32 (v5e has no bf16 VPU/EUP; keep elementwise math f32).
    return jnp.where(y > 0, y, jnp.exp(jnp.minimum(y, 0.0)) - 1.0)


# ----------------------------------------------------------------------------
# Fused kernel: normalize(as bias) + 3x3 conv (im2col matmul) + ELU
#               + 1x1 conv + channel softmax + disparity expectation + depth
# ----------------------------------------------------------------------------
def _fused_kernel(patch_ref, wbb_ref, bbb_ref, wf_ref, bf_ref, disp_ref,
                  logits_ref, prob_ref, disparity_ref, depth_ref,
                  *, depth_const):
    # ---- backbone stand-in: 3x3 conv (mean folded into bias) + ELU
    x = patch_ref[...]                                               # (tm, 9*Cin) bf16
    feat = jnp.dot(x, wbb_ref[...], preferred_element_type=jnp.float32)
    feat = _elu_f32(feat + bbb_ref[...])
    feat = feat.astype(jnp.bfloat16)                                 # MXU-native operand

    # ---- head: 1x1 conv (matmul + bias), f32 accumulation
    logits = jnp.dot(feat, wf_ref[...], preferred_element_type=jnp.float32)
    logits = logits + bf_ref[...]
    logits_ref[...] = logits.astype(logits_ref.dtype)

    # ---- softmax over channels (f32 math; divide goes to the EUP)
    m = jnp.max(logits, axis=-1, keepdims=True)
    e = jnp.exp(logits - m)
    s = jnp.sum(e, axis=-1, keepdims=True)
    prob = e * pl.reciprocal(s, approx=True)
    prob_ref[...] = prob.astype(prob_ref.dtype)

    # ---- disparity = E_c[prob * disparity_layered],  depth = const / disparity
    disp = jnp.sum(prob * disp_ref[...], axis=-1, keepdims=True)     # (tm, 1)
    disparity_ref[...] = disp
    depth_ref[...] = depth_const * pl.reciprocal(disp, approx=True)


def falnet_fused(patches_bf16, w_bb, b_bb, w_final, b_final, disp_row,
                 *, width, tm=1024, vmem_limit_bytes=None):
    Mp, K = patches_bf16.shape
    C = w_bb.shape[1]
    assert Mp % tm == 0
    kernel = functools.partial(_fused_kernel,
                               depth_const=0.1 * 0.58 * float(width))
    return pl.pallas_call(
        kernel,
        out_shape=(
            jax.ShapeDtypeStruct((Mp, C), jnp.bfloat16),   # logits
            jax.ShapeDtypeStruct((Mp, C), jnp.bfloat16),   # probability
            jax.ShapeDtypeStruct((Mp, 1), jnp.float32),    # disparity
            jax.ShapeDtypeStruct((Mp, 1), jnp.float32),    # depth
        ),
        grid_spec=pltpu.PrefetchScalarGridSpec(
            num_scalar_prefetch=0,
            grid=(Mp // tm,),
            in_specs=[
                pl.BlockSpec((tm, K), lambda i: (i, 0)),   # im2col patches (streamed)
                pl.BlockSpec((K, C), lambda i: (0, 0)),    # W_backbone (resident)
                pl.BlockSpec((1, C), lambda i: (0, 0)),    # folded normalize bias
                pl.BlockSpec((C, C), lambda i: (0, 0)),    # W_final
                pl.BlockSpec((1, C), lambda i: (0, 0)),    # b_final
                pl.BlockSpec((1, C), lambda i: (0, 0)),    # disparity layers
            ],
            out_specs=(
                pl.BlockSpec((tm, C), lambda i: (i, 0)),
                pl.BlockSpec((tm, C), lambda i: (i, 0)),
                pl.BlockSpec((tm, 1), lambda i: (i, 0)),
                pl.BlockSpec((tm, 1), lambda i: (i, 0)),
            ),
        ),
        compiler_params=pltpu.CompilerParams(
            dimension_semantics=("parallel",),             # shards across v7x's 2 TCs
            vmem_limit_bytes=vmem_limit_bytes,             # raise for tm >= 4096 sweeps
        ),
    )(patches_bf16, w_bb, b_bb, w_final, b_final, disp_row)


# ----------------------------------------------------------------------------
# Full forward wrapper (glue: im2col, padding, constant outputs)
# ----------------------------------------------------------------------------
def falnet_forward(x_nchw, params, *, height, width, output_channels,
                   tm=1024, channels_last=True, vmem_limit_bytes=None):
    N, Cin, H, W = x_nchw.shape
    assert (H, W) == (height, width)
    assert tm % 128 == 0
    C = output_channels

    # NHWC + bf16 BEFORE the 9x patch replication: halves the im2col
    # intermediate feeding the kernel.  Values are identical to casting after.
    x = jnp.transpose(x_nchw, (0, 2, 3, 1)).astype(jnp.bfloat16)         # NHWC bf16

    # im2col for the 3x3 SAME-padded stand-in conv (XLA glue).
    xp = jnp.pad(x, ((0, 0), (1, 1), (1, 1), (0, 0)))
    cols = [xp[:, i:i + H, j:j + W, :] for i in range(3) for j in range(3)]
    patches = jnp.stack(cols, axis=3).reshape(N * H * W, 9 * Cin)        # bf16

    M = N * H * W
    Mp = pl.cdiv(M, tm) * tm
    if Mp != M:
        patches = jnp.pad(patches, ((0, Mp - M), (0, 0)))                # zero rows: safe

    # Fold torchvision Normalize (mean subtract, std=1) into the conv bias.
    w_bb_f32 = params["w_backbone"]
    b_bb = -(params["mean_patch"] @ w_bb_f32)                            # (1, C) f32

    logits, prob, disparity, depth = falnet_fused(
        patches,
        w_bb_f32.astype(jnp.bfloat16),
        b_bb.astype(jnp.float32),
        params["w_final"].astype(jnp.bfloat16),
        params["b_final"].astype(jnp.float32),
        params["disp_vec"].astype(jnp.float32),
        width=width, tm=tm, vmem_limit_bytes=vmem_limit_bytes,
    )

    def unflatten(flat, c):
        return flat[:M].reshape(N, H, W, c)

    logits = unflatten(logits, C)
    prob = unflatten(prob, C)
    disparity = unflatten(disparity, 1)
    depth = unflatten(depth, 1)

    # Constant broadcasts, kept only for output-dict parity with PyTorch
    # (PyTorch returns .expand() views; these stay lazy unless consumed).
    disp_layered = jnp.broadcast_to(params["disp_vec"].reshape(1, 1, 1, C),
                                    (N, H, W, C))
    padding_mask = jnp.ones((1, H, W, C), jnp.float32)

    if not channels_last:
        # PyTorch-parity NCHW layout (costs one full HBM round trip per output).
        to_nchw = lambda t: jnp.transpose(t, (0, 3, 1, 2))
        logits, prob, disparity, depth = map(to_nchw,
                                             (logits, prob, disparity, depth))
        disp_layered = to_nchw(disp_layered)
        padding_mask = to_nchw(padding_mask)

    return {
        "logits": logits,
        "probability": prob,
        "disparity_layered": disp_layered,
        "padding_mask": padding_mask,
        "disparity": disparity,
        "depth": depth,
    }


# ----------------------------------------------------------------------------
if __name__ == "__main__":
    N, H, W = 2, 16, 16
    C = 32                               # output_channels
    disparity_min, disparity_max = 2.0, 300.0
    TM = 256                             # small tile for the tiny test -> grid length 2

    key = jax.random.PRNGKey(0)
    kx, kb, kf = jax.random.split(key, 3)

    x = jax.random.uniform(kx, (N, 3, H, W), jnp.float32)

    mean = jnp.array([0.411, 0.432, 0.45], jnp.float32)
    disp_vec = (
        disparity_max
        * (disparity_min / disparity_max)
        ** (jnp.arange(C, dtype=jnp.float32) / (C - 1))
    )[None, :]                                                           # (1, C)

    params = {
        # per-column mean for im2col patches (patch-position major, channel minor)
        "mean_patch": jnp.tile(mean, 9)[None, :],                        # (1, 27)
        "w_backbone": jax.random.normal(kb, (27, C), jnp.float32) * jnp.sqrt(2.0 / 27.0),
        "w_final": jax.random.normal(kf, (C, C), jnp.float32) * jnp.sqrt(2.0 / C),
        "b_final": jnp.zeros((1, C), jnp.float32),
        "disp_vec": disp_vec,
    }

    outs = falnet_forward(x, params, height=H, width=W, output_channels=C,
                          tm=TM, channels_last=True)
    jax.block_until_ready(outs)

    # ---- pure-JAX reference mirroring the kernel's bf16 operand quantization
    x_nhwc = jnp.transpose(x, (0, 2, 3, 1)).astype(jnp.bfloat16)
    xp = jnp.pad(x_nhwc, ((0, 0), (1, 1), (1, 1), (0, 0)))
    patches_ref = jnp.stack(
        [xp[:, i:i + H, j:j + W, :] for i in range(3) for j in range(3)], axis=3
    ).reshape(N * H * W, 27)
    b_bb_ref = -(params["mean_patch"] @ params["w_backbone"])
    feat_ref = jnp.dot(patches_ref, params["w_backbone"].astype(jnp.bfloat16),
                       preferred_element_type=jnp.float32) + b_bb_ref
    feat_ref = jnp.where(feat_ref > 0, feat_ref,
                         jnp.exp(jnp.minimum(feat_ref, 0.0)) - 1.0).astype(jnp.bfloat16)
    logits_ref = jnp.dot(feat_ref, params["w_final"].astype(jnp.bfloat16),
                         preferred_element_type=jnp.float32) + params["b_final"]
    prob_ref = jax.nn.softmax(logits_ref, axis=-1)
    disp_ref = jnp.sum(prob_ref * params["disp_vec"], axis=-1, keepdims=True)
    depth_ref = 0.1 * 0.58 * W / disp_ref

    got_disp = outs["disparity"].reshape(-1, 1)
    got_depth = outs["depth"].reshape(-1, 1)
    got_prob = outs["probability"].reshape(-1, C).astype(jnp.float32)

    assert jnp.allclose(got_disp, disp_ref, rtol=5e-2, atol=5e-2), "disparity mismatch"
    assert jnp.allclose(got_depth, depth_ref, rtol=5e-2, atol=5e-2), "depth mismatch"
    assert jnp.allclose(jnp.sum(got_prob, axis=-1), 1.0, atol=3e-2), "prob not normalized"
    assert jnp.allclose(got_prob, prob_ref, rtol=5e-2, atol=2e-2), "probability mismatch"

    print("KERNEL_OK")
</pallas_src>

<mosaic_0001>
module attributes {stable_mosaic.version = 11 : i64} {
  func.func @_fused_kernel(%arg0: i32, %arg1: memref<256x27xbf16, #tpu.memory_space<vmem>>, %arg2: memref<27x32xbf16, #tpu.memory_space<vmem>>, %arg3: memref<1x32xf32, #tpu.memory_space<vmem>>, %arg4: memref<32x32xbf16, #tpu.memory_space<vmem>>, %arg5: memref<1x32xf32, #tpu.memory_space<vmem>>, %arg6: memref<1x32xf32, #tpu.memory_space<vmem>>, %arg7: memref<256x32xbf16, #tpu.memory_space<vmem>>, %arg8: memref<256x32xbf16, #tpu.memory_space<vmem>>, %arg9: memref<256x1xf32, #tpu.memory_space<vmem>>, %arg10: memref<256x1xf32, #tpu.memory_space<vmem>>) attributes {dimension_semantics = [#tpu.dimension_semantics<parallel>], iteration_bounds = array<i64: 2>, scalar_prefetch = 0 : i64, scratch_operands = 0 : i64, tpu.core_type = #tpu.core_type<tc>, window_params = [{transform_indices = @transform_0, window_bounds = array<i64: 256, 27>}, {pipeline_mode = #tpu.pipeline_mode<synchronous>, transform_indices = @transform_1, window_bounds = array<i64: 27, 32>}, {pipeline_mode = #tpu.pipeline_mode<synchronous>, transform_indices = @transform_2, window_bounds = array<i64: 1, 32>}, {pipeline_mode = #tpu.pipeline_mode<synchronous>, transform_indices = @transform_3, window_bounds = array<i64: 32, 32>}, {pipeline_mode = #tpu.pipeline_mode<synchronous>, transform_indices = @transform_4, window_bounds = array<i64: 1, 32>}, {pipeline_mode = #tpu.pipeline_mode<synchronous>, transform_indices = @transform_5, window_bounds = array<i64: 1, 32>}, {transform_indices = @transform_6, window_bounds = array<i64: 256, 32>}, {transform_indices = @transform_7, window_bounds = array<i64: 256, 32>}, {transform_indices = @transform_8, window_bounds = array<i64: 256, 1>}, {transform_indices = @transform_9, window_bounds = array<i64: 256, 1>}]} {
    %c0 = arith.constant 0 : index
    %c0_0 = arith.constant 0 : index
    %0 = vector.load %arg1[%c0, %c0_0] : memref<256x27xbf16, #tpu.memory_space<vmem>>, vector<256x27xbf16>
    %c0_1 = arith.constant 0 : index
    %c0_2 = arith.constant 0 : index
    %1 = vector.load %arg2[%c0_1, %c0_2] : memref<27x32xbf16, #tpu.memory_space<vmem>>, vector<27x32xbf16>
    %cst = arith.constant dense<0.000000e+00> : vector<256x32xf32>
    %2 = tpu.matmul %0, %1, %cst {dimension_numbers = #tpu.dot_dimension_numbers<[1], [0], [0], [1], [0, 0, 1, 1], [], []>} : vector<256x27xbf16>, vector<27x32xbf16>, vector<256x32xf32> -> vector<256x32xf32>
    %c0_3 = arith.constant 0 : index
    %c0_4 = arith.constant 0 : index
    %3 = vector.load %arg3[%c0_3, %c0_4] : memref<1x32xf32, #tpu.memory_space<vmem>>, vector<1x32xf32>
    %4 = vector.broadcast %3 : vector<1x32xf32> to vector<256x32xf32>
    %5 = arith.addf %2, %4 : vector<256x32xf32>
    %cst_5 = arith.constant 0.000000e+00 : f32
    %6 = vector.broadcast %cst_5 : f32 to vector<256x32xf32>
    %7 = arith.cmpf ogt, %5, %6 : vector<256x32xf32>
    %cst_6 = arith.constant 0.000000e+00 : f32
    %8 = vector.broadcast %cst_6 : f32 to vector<256x32xf32>
    %9 = arith.minimumf %5, %8 : vector<256x32xf32>
    %10 = math.exp %9 : vector<256x32xf32>
    %cst_7 = arith.constant 1.000000e+00 : f32
    %11 = vector.broadcast %cst_7 : f32 to vector<256x32xf32>
    %12 = arith.subf %10, %11 : vector<256x32xf32>
    %13 = arith.select %7, %5, %12 : vector<256x32xi1>, vector<256x32xf32>
    %14 = arith.truncf %13 : vector<256x32xf32> to vector<256x32xbf16>
    %c0_8 = arith.constant 0 : index
    %c0_9 = arith.constant 0 : index
    %15 = vector.load %arg4[%c0_8, %c0_9] : memref<32x32xbf16, #tpu.memory_space<vmem>>, vector<32x32xbf16>
    %cst_10 = arith.constant dense<0.000000e+00> : vector<256x32xf32>
    %16 = tpu.matmul %14, %15, %cst_10 {dimension_numbers = #tpu.dot_dimension_numbers<[1], [0], [0], [1], [0, 0, 1, 1], [], []>} : vector<256x32xbf16>, vector<32x32xbf16>, vector<256x32xf32> -> vector<256x32xf32>
    %c0_11 = arith.constant 0 : index
    %c0_12 = arith.constant 0 : index
    %17 = vector.load %arg5[%c0_11, %c0_12] : memref<1x32xf32, #tpu.memory_space<vmem>>, vector<1x32xf32>
    %18 = vector.broadcast %17 : vector<1x32xf32> to vector<256x32xf32>
    %19 = arith.addf %16, %18 : vector<256x32xf32>
    %20 = arith.truncf %19 : vector<256x32xf32> to vector<256x32xbf16>
    %c0_13 = arith.constant 0 : index
    %c0_14 = arith.constant 0 : index
    %21 = vector.load %arg7[%c0_13, %c0_14] : memref<256x32xbf16, #tpu.memory_space<vmem>>, vector<256x32xbf16>
    tpu.vector_store %arg7[%c0_13, %c0_14], %20 {strides = array<i32>} : memref<256x32xbf16, #tpu.memory_space<vmem>>, vector<256x32xbf16>,
    %cst_15 = arith.constant dense<0xFF800000> : vector<256xf32>
    %22 = vector.multi_reduction <maximumf>, %19, %cst_15 [1] : vector<256x32xf32> to vector<256xf32>
    %23 = vector.shape_cast %22 : vector<256xf32> to vector<256x1xf32>
    %24 = vector.broadcast %23 : vector<256x1xf32> to vector<256x32xf32>
    %25 = arith.subf %19, %24 : vector<256x32xf32>
    %26 = math.exp %25 : vector<256x32xf32>
    %cst_16 = arith.constant dense<0.000000e+00> : vector<256xf32>
    %27 = vector.multi_reduction <add>, %26, %cst_16 [1] : vector<256x32xf32> to vector<256xf32>
    %28 = vector.shape_cast %27 : vector<256xf32> to vector<256x1xf32>
    %29 = tpu.reciprocal %28 {approx = true} : vector<256x1xf32> -> vector<256x1xf32>
    %30 = vector.broadcast %29 : vector<256x1xf32> to vector<256x32xf32>
    %31 = arith.mulf %26, %30 : vector<256x32xf32>
    %32 = arith.truncf %31 : vector<256x32xf32> to vector<256x32xbf16>
    %c0_17 = arith.constant 0 : index
    %c0_18 = arith.constant 0 : index
    %33 = vector.load %arg8[%c0_17, %c0_18] : memref<256x32xbf16, #tpu.memory_space<vmem>>, vector<256x32xbf16>
    tpu.vector_store %arg8[%c0_17, %c0_18], %32 {strides = array<i32>} : memref<256x32xbf16, #tpu.memory_space<vmem>>, vector<256x32xbf16>,
    %c0_19 = arith.constant 0 : index
    %c0_20 = arith.constant 0 : index
    %34 = vector.load %arg6[%c0_19, %c0_20] : memref<1x32xf32, #tpu.memory_space<vmem>>, vector<1x32xf32>
    %35 = vector.broadcast %34 : vector<1x32xf32> to vector<256x32xf32>
    %36 = arith.mulf %31, %35 : vector<256x32xf32>
    %cst_21 = arith.constant dense<0.000000e+00> : vector<256xf32>
    %37 = vector.multi_reduction <add>, %36, %cst_21 [1] : vector<256x32xf32> to vector<256xf32>
    %38 = vector.shape_cast %37 : vector<256xf32> to vector<256x1xf32>
    %c0_22 = arith.constant 0 : index
    %c0_23 = arith.constant 0 : index
    %39 = vector.load %arg9[%c0_22, %c0_23] : memref<256x1xf32, #tpu.memory_space<vmem>>, vector<256x1xf32>
    tpu.vector_store %arg9[%c0_22, %c0_23], %38 {strides = array<i32>} : memref<256x1xf32, #tpu.memory_space<vmem>>, vector<256x1xf32>,
    %40 = tpu.reciprocal %38 {approx = true} : vector<256x1xf32> -> vector<256x1xf32>
    %cst_24 = arith.constant 0.927999973 : f32
    %41 = vector.broadcast %cst_24 : f32 to vector<256x1xf32>
    %42 = arith.mulf %41, %40 : vector<256x1xf32>
    %c0_25 = arith.constant 0 : index
    %c0_26 = arith.constant 0 : index
    %43 = vector.load %arg10[%c0_25, %c0_26] : memref<256x1xf32, #tpu.memory_space<vmem>>, vector<256x1xf32>
    tpu.vector_store %arg10[%c0_25, %c0_26], %42 {strides = array<i32>} : memref<256x1xf32, #tpu.memory_space<vmem>>, vector<256x1xf32>,
    return
  }
  func.func @transform_0(%arg0: i32) -> (i32, i32) {
    %c0_i32 = arith.constant 0 : i32
    %c0_i32_0 = arith.constant 0 : i32
    return %arg0, %c0_i32 : i32, i32
  }
  func.func @transform_1(%arg0: i32) -> (i32, i32) {
    %c0_i32 = arith.constant 0 : i32
    %c0_i32_0 = arith.constant 0 : i32
    %c0_i32_1 = arith.constant 0 : i32
    return %c0_i32, %c0_i32_0 : i32, i32
  }
  func.func @transform_2(%arg0: i32) -> (i32, i32) {
    %c0_i32 = arith.constant 0 : i32
    %c0_i32_0 = arith.constant 0 : i32
    %c0_i32_1 = arith.constant 0 : i32
    return %c0_i32, %c0_i32_0 : i32, i32
  }
  func.func @transform_3(%arg0: i32) -> (i32, i32) {
    %c0_i32 = arith.constant 0 : i32
    %c0_i32_0 = arith.constant 0 : i32
    %c0_i32_1 = arith.constant 0 : i32
    return %c0_i32, %c0_i32_0 : i32, i32
  }
  func.func @transform_4(%arg0: i32) -> (i32, i32) {
    %c0_i32 = arith.constant 0 : i32
    %c0_i32_0 = arith.constant 0 : i32
    %c0_i32_1 = arith.constant 0 : i32
    return %c0_i32, %c0_i32_0 : i32, i32
  }
  func.func @transform_5(%arg0: i32) -> (i32, i32) {
    %c0_i32 = arith.constant 0 : i32
    %c0_i32_0 = arith.constant 0 : i32
    %c0_i32_1 = arith.constant 0 : i32
    return %c0_i32, %c0_i32_0 : i32, i32
  }
  func.func @transform_6(%arg0: i32) -> (i32, i32) {
    %c0_i32 = arith.constant 0 : i32
    %c0_i32_0 = arith.constant 0 : i32
    return %arg0, %c0_i32 : i32, i32
  }
  func.func @transform_7(%arg0: i32) -> (i32, i32) {
    %c0_i32 = arith.constant 0 : i32
    %c0_i32_0 = arith.constant 0 : i32
    return %arg0, %c0_i32 : i32, i32
  }
  func.func @transform_8(%arg0: i32) -> (i32, i32) {
    %c0_i32 = arith.constant 0 : i32
    %c0_i32_0 = arith.constant 0 : i32
    return %arg0, %c0_i32 : i32, i32
  }
  func.func @transform_9(%arg0: i32) -> (i32, i32) {
    %c0_i32 = arith.constant 0 : i32
    %c0_i32_0 = arith.constant 0 : i32
    return %arg0, %c0_i32 : i32, i32
  }
}

</mosaic_0001>

<llo_original>
// kernel: tpu_custom_call.1
$region0: #{tpu_custom_call.1}
  #allocation0 [shape = 'u32[]', space=smem, size = 0x4, offset = 0x4, fixed_abs, tag = 'smem constant byte address 0x4 - core index']
  #allocation1 [shape = 'u32[144,128]{1,0:T(1,128)}', space=vmem, size = 0x12000, scoped, tag = 'internal scratch']
  %s0 = inlined_call_operand.vmem [shape: bf16[512,27], index: 0, kind: input, shape index: {}]
  %s1 = inlined_call_operand.vmem [shape: bf16[27,32], index: 1, kind: input, shape index: {}]
  %s2 = inlined_call_operand.vmem [shape: f32[1,32], index: 2, kind: input, shape index: {}]
  %s3 = inlined_call_operand.vmem [shape: bf16[32,32], index: 3, kind: input, shape index: {}]
  %s4 = inlined_call_operand.vmem [shape: f32[1,32], index: 4, kind: input, shape index: {}]
  %s5 = inlined_call_operand.vmem [shape: f32[1,32], index: 5, kind: input, shape index: {}]
  %s6 = inlined_call_operand.vmem [shape: bf16[512,32], index: 6, kind: output, shape index: {0}]
  %s7 = inlined_call_operand.vmem [shape: bf16[512,32], index: 7, kind: output, shape index: {1}]
  %s8 = inlined_call_operand.vmem [shape: f32[512,1], index: 8, kind: output, shape index: {2}]
  %s9 = inlined_call_operand.vmem [shape: f32[512,1], index: 9, kind: output, shape index: {3}]
  %10 = xla_tuple %s6, %s7, %s8, %s9
  %s11 = sld [smem:[#allocation0]]
  $region81: #{tpu_custom_call.1} parent=0
    _
  %s13 = ssub.s32 1, %s11
  %s14 = scalar_select 0, %s13, %s11
  loop: start=0, step=1, limit=4
  $region2: #{tpu_custom_call.1} parent=0 // loop_pre_header
    _
  $region3: #{tpu_custom_call.1} parent=0 // loop_header
    %s16 = sphi 0, %s20
    %p17 = scmp.ge.s32.totalorder %s16, 4
    %s26 = sphi 0, %s28
    %s29 = sphi 0, %s26
    %s30 = sphi 0, %s29
    %s46 = sphi 0, %s30
    %s50 = sphi 0, %s50
    %s52 = sphi 0, %s50
    %s53 = sphi 0, %s52
    %s67 = sphi 0, %s53
    %s71 = sphi 0, %s71
    %s73 = sphi 0, %s71
    %s74 = sphi 0, %s73
    %s88 = sphi 0, %s74
    %s92 = sphi 0, %s92
    %s94 = sphi 0, %s92
    %s95 = sphi 0, %s94
    %s109 = sphi 0, %s95
    %s113 = sphi 0, %s113
    %s115 = sphi 0, %s113
    %s116 = sphi 0, %s115
    %s130 = sphi 0, %s116
    %s134 = sphi 0, %s134
    %s136 = sphi 0, %s134
    %s137 = sphi 0, %s136
    %s151 = sphi 0, %s137
    %s157 = sphi 0, %s159
    %s160 = sphi 0, %s157
    %s161 = sphi 0, %s160
    %s177 = sphi 0, %s161
    %s183 = sphi 0, %s185
    %s186 = sphi 0, %s183
    %s187 = sphi 0, %s186
    %s203 = sphi 0, %s187
    %s209 = sphi 0, %s211
    %s212 = sphi 0, %s209
    %s213 = sphi 0, %s212
    %s229 = sphi 0, %s213
    %s235 = sphi 0, %s237
    %s238 = sphi 0, %s235
    %s239 = sphi 0, %s238
    %s255 = sphi 0, %s239
  $region4: #{tpu_custom_call.1} parent=0 // loop_header_branch
    %19 = sbr.rel (%p17) target = $region8
  $region5: #{tpu_custom_call.1} parent=0 // loop_body
    %s21 = ssub.s32 %s16, 1
    %s22 = ssub.s32 %s16, 2
    %s23 = sadd.s32 %s16, 1
    %s24 = ssub.s32 %s16, %s23
    %p25 = scmp.eq.s32.totalorder %s24, 0
    %s27 = sadd.s32 %s26, 1
    %s28 = scalar_select %p25, %s26, %s27
    %p31 = pneg %p25
    %p32 = scmp.eq.s32.totalorder %s16, 1
    %p33 = por %p31, %p32
    %p34 = scmp.ne.s32.totalorder %s26, %s29
    %p35 = scmp.eq.s32.totalorder %s16, 0
    %p36 = por %p34, %p35
    %p37 = scmp.ne.s32.totalorder %s26, %s29
    %p38 = scmp.eq.s32.totalorder %s21, 1
    %p39 = por %p37, %p38
    %p40 = scmp.ne.s32.totalorder %s29, %s30
    %p41 = scmp.eq.s32.totalorder %s21, 0
    %p42 = por %p40, %p41
    %p43 = scmp.ne.s32.totalorder %s29, %s30
    %p44 = scmp.eq.s32.totalorder %s22, 1
    %p45 = por %p43, %p44
    %p47 = scmp.ne.s32.totalorder %s30, %s46
    %p48 = scmp.eq.s32.totalorder %s22, 0
    %p49 = por %p47, %p48
    %s51 = sadd.s32 %s50, 1
    %p54 = scmp.eq.s32.totalorder %s16, 1
    %p55 = scmp.ne.s32.totalorder %s50, %s52
    %p56 = scmp.eq.s32.totalorder %s16, 0
    %p57 = por %p55, %p56
    %p58 = scmp.ne.s32.totalorder %s50, %s52
    %p59 = scmp.eq.s32.totalorder %s21, 1
    %p60 = por %p58, %p59
    %p61 = scmp.ne.s32.totalorder %s52, %s53
    %p62 = scmp.eq.s32.totalorder %s21, 0
    %p63 = por %p61, %p62
    %p64 = scmp.ne.s32.totalorder %s52, %s53
    %p65 = scmp.eq.s32.totalorder %s22, 1
    %p66 = por %p64, %p65
    %p68 = scmp.ne.s32.totalorder %s53, %s67
    %p69 = scmp.eq.s32.totalorder %s22, 0
    %p70 = por %p68, %p69
    %s72 = sadd.s32 %s71, 1
    %p75 = scmp.eq.s32.totalorder %s16, 1
    %p76 = scmp.ne.s32.totalorder %s71, %s73
    %p77 = scmp.eq.s32.totalorder %s16, 0
    %p78 = por %p76, %p77
    %p79 = scmp.ne.s32.totalorder %s71, %s73
    %p80 = scmp.eq.s32.totalorder %s21, 1
    %p81 = por %p79, %p80
    %p82 = scmp.ne.s32.totalorder %s73, %s74
    %p83 = scmp.eq.s32.totalorder %s21, 0
    %p84 = por %p82, %p83
    %p85 = scmp.ne.s32.totalorder %s73, %s74
    %p86 = scmp.eq.s32.totalorder %s22, 1
    %p87 = por %p85, %p86
    %p89 = scmp.ne.s32.totalorder %s74, %s88
    %p90 = scmp.eq.s32.totalorder %s22, 0
    %p91 = por %p89, %p90
    %s93 = sadd.s32 %s92, 1
    %p96 = scmp.eq.s32.totalorder %s16, 1
    %p97 = scmp.ne.s32.totalorder %s92, %s94
    %p98 = scmp.eq.s32.totalorder %s16, 0
    %p99 = por %p97, %p98
    %p100 = scmp.ne.s32.totalorder %s92, %s94
    %p101 = scmp.eq.s32.totalorder %s21, 1
    %p102 = por %p100, %p101
    %p103 = scmp.ne.s32.totalorder %s94, %s95
    %p104 = scmp.eq.s32.totalorder %s21, 0
    %p105 = por %p103, %p104
    %p106 = scmp.ne.s32.totalorder %s94, %s95
    %p107 = scmp.eq.s32.totalorder %s22, 1
    %p108 = por %p106, %p107
    %p110 = scmp.ne.s32.totalorder %s95, %s109
    %p111 = scmp.eq.s32.totalorder %s22, 0
    %p112 = por %p110, %p111
    %s114 = sadd.s32 %s113, 1
    %p117 = scmp.eq.s32.totalorder %s16, 1
    %p118 = scmp.ne.s32.totalorder %s113, %s115
    %p119 = scmp.eq.s32.totalorder %s16, 0
    %p120 = por %p118, %p119
    %p121 = scmp.ne.s32.totalorder %s113, %s115
    %p122 = scmp.eq.s32.totalorder %s21, 1
    %p123 = por %p121, %p122
    %p124 = scmp.ne.s32.totalorder %s115, %s116
    %p125 = scmp.eq.s32.totalorder %s21, 0
    %p126 = por %p124, %p125
    %p127 = scmp.ne.s32.totalorder %s115, %s116
    %p128 = scmp.eq.s32.totalorder %s22, 1
    %p129 = por %p127, %p128
    %p131 = scmp.ne.s32.totalorder %s116, %s130
    %p132 = scmp.eq.s32.totalorder %s22, 0
    %p133 = por %p131, %p132
    %s135 = sadd.s32 %s134, 1
    %p138 = scmp.eq.s32.totalorder %s16, 1
    %p139 = scmp.ne.s32.totalorder %s134, %s136
    %p140 = scmp.eq.s32.totalorder %s16, 0
    %p141 = por %p139, %p140
    %p142 = scmp.ne.s32.totalorder %s134, %s136
    %p143 = scmp.eq.s32.totalorder %s21, 1
    %p144 = por %p142, %p143
    %p145 = scmp.ne.s32.totalorder %s136, %s137
    %p146 = scmp.eq.s32.totalorder %s21, 0
    %p147 = por %p145, %p146
    %p148 = scmp.ne.s32.totalorder %s136, %s137
    %p149 = scmp.eq.s32.totalorder %s22, 1
    %p150 = por %p148, %p149
    %p152 = scmp.ne.s32.totalorder %s137, %s151
    %p153 = scmp.eq.s32.totalorder %s22, 0
    %p154 = por %p152, %p153
    %s155 = ssub.s32 %s16, %s23
    %p156 = scmp.eq.s32.totalorder %s155, 0
    %s158 = sadd.s32 %s157, 1
    %s159 = scalar_select %p156, %s157, %s158
    %p162 = pneg %p156
    %p163 = scmp.eq.s32.totalorder %s16, 1
    %p164 = por %p162, %p163
    %p165 = scmp.ne.s32.totalorder %s157, %s160
    %p166 = scmp.eq.s32.totalorder %s16, 0
    %p167 = por %p165, %p166
    %p168 = scmp.ne.s32.totalorder %s157, %s160
    %p169 = scmp.eq.s32.totalorder %s21, 1
    %p170 = por %p168, %p169
    %p171 = scmp.ne.s32.totalorder %s160, %s161
    %p172 = scmp.eq.s32.totalorder %s21, 0
    %p173 = por %p171, %p172
    %p174 = scmp.ne.s32.totalorder %s160, %s161
    %p175 = scmp.eq.s32.totalorder %s22, 1
    %p176 = por %p174, %p175
    %p178 = scmp.ne.s32.totalorder %s161, %s177
    %p179 = scmp.eq.s32.totalorder %s22, 0
    %p180 = por %p178, %p179
    %s181 = ssub.s32 %s16, %s23
    %p182 = scmp.eq.s32.totalorder %s181, 0
    %s184 = sadd.s32 %s183, 1
    %s185 = scalar_select %p182, %s183, %s184
    %p188 = pneg %p182
    %p189 = scmp.eq.s32.totalorder %s16, 1
    %p190 = por %p188, %p189
    %p191 = scmp.ne.s32.totalorder %s183, %s186
    %p192 = scmp.eq.s32.totalorder %s16, 0
    %p193 = por %p191, %p192
    %p194 = scmp.ne.s32.totalorder %s183, %s186
    %p195 = scmp.eq.s32.totalorder %s21, 1
    %p196 = por %p194, %p195
    %p197 = scmp.ne.s32.totalorder %s186, %s187
    %p198 = scmp.eq.s32.totalorder %s21, 0
    %p199 = por %p197, %p198
    %p200 = scmp.ne.s32.totalorder %s186, %s187
    %p201 = scmp.eq.s32.totalorder %s22, 1
    %p202 = por %p200, %p201
    %p204 = scmp.ne.s32.totalorder %s187, %s203
    %p205 = scmp.eq.s32.totalorder %s22, 0
    %p206 = por %p204, %p205
    %s207 = ssub.s32 %s16, %s23
    %p208 = scmp.eq.s32.totalorder %s207, 0
    %s210 = sadd.s32 %s209, 1
    %s211 = scalar_select %p208, %s209, %s210
    %p214 = pneg %p208
    %p215 = scmp.eq.s32.totalorder %s16, 1
    %p216 = por %p214, %p215
    %p217 = scmp.ne.s32.totalorder %s209, %s212
    %p218 = scmp.eq.s32.totalorder %s16, 0
    %p219 = por %p217, %p218
    %p220 = scmp.ne.s32.totalorder %s209, %s212
    %p221 = scmp.eq.s32.totalorder %s21, 1
    %p222 = por %p220, %p221
    %p223 = scmp.ne.s32.totalorder %s212, %s213
    %p224 = scmp.eq.s32.totalorder %s21, 0
    %p225 = por %p223, %p224
    %p226 = scmp.ne.s32.totalorder %s212, %s213
    %p227 = scmp.eq.s32.totalorder %s22, 1
    %p228 = por %p226, %p227
    %p230 = scmp.ne.s32.totalorder %s213, %s229
    %p231 = scmp.eq.s32.totalorder %s22, 0
    %p232 = por %p230, %p231
    %s233 = ssub.s32 %s16, %s23
    %p234 = scmp.eq.s32.totalorder %s233, 0
    %s236 = sadd.s32 %s235, 1
    %s237 = scalar_select %p234, %s235, %s236
    %p240 = pneg %p234
    %p241 = scmp.eq.s32.totalorder %s16, 1
    %p242 = por %p240, %p241
    %p243 = scmp.ne.s32.totalorder %s235, %s238
    %p244 = scmp.eq.s32.totalorder %s16, 0
    %p245 = por %p243, %p244
    %p246 = scmp.ne.s32.totalorder %s235, %s238
    %p247 = scmp.eq.s32.totalorder %s21, 1
    %p248 = por %p246, %p247
    %p249 = scmp.ne.s32.totalorder %s238, %s239
    %p250 = scmp.eq.s32.totalorder %s21, 0
    %p251 = por %p249, %p250
    %p252 = scmp.ne.s32.totalorder %s238, %s239
    %p253 = scmp.eq.s32.totalorder %s22, 1
    %p254 = por %p252, %p253
    %p256 = scmp.ne.s32.totalorder %s239, %s255
    %p257 = scmp.eq.s32.totalorder %s22, 0
    %p258 = por %p256, %p257
    %p259 = scmp.le.s32.totalorder 1, %s16
    %p260 = scmp.lt.s32.totalorder %s16, 3
    %p261 = pnand %p259, %p260
    %p262 = pneg %p261
    // Predicated region
    $region9: #{tpu_custom_call.1} parent=5 // pred_check
      _
    $region10: #{tpu_custom_call.1} parent=5 // pred_check_branch
      %264 = sbr.rel (%p261) target = $region12
    $region11: #{tpu_custom_call.1} parent=5 // pred_region
      %s265 = ssub.s32 %s16, 1
      // Predicated region
      $region13: #{tpu_custom_call.1} parent=11 // pred_check
        %p266 = pneg %p63
      $region14: #{tpu_custom_call.1} parent=11 // pred_check_branch
        %268 = sbr.rel (%p266) target = $region16
      $region15: #{tpu_custom_call.1} parent=11 // pred_region
        _
      $region16: #{tpu_custom_call.1} parent=11 // pred_fallthru
        _
      // Predicated region
      $region17: #{tpu_custom_call.1} parent=11 // pred_check
        %p269 = pneg %p84
      $region18: #{tpu_custom_call.1} parent=11 // pred_check_branch
        %271 = sbr.rel (%p269) target = $region20
      $region19: #{tpu_custom_call.1} parent=11 // pred_region
        _
      $region20: #{tpu_custom_call.1} parent=11 // pred_fallthru
        _
      // Predicated region
      $region21: #{tpu_custom_call.1} parent=11 // pred_check
        %p272 = pneg %p105
      $region22: #{tpu_custom_call.1} parent=11 // pred_check_branch
        %274 = sbr.rel (%p272) target = $region24
      $region23: #{tpu_custom_call.1} parent=11 // pred_region
        _
      $region24: #{tpu_custom_call.1} parent=11 // pred_fallthru
        _
      // Predicated region
      $region25: #{tpu_custom_call.1} parent=11 // pred_check
        %p275 = pneg %p126
      $region26: #{tpu_custom_call.1} parent=11 // pred_check_branch
        %277 = sbr.rel (%p275) target = $region28
      $region27: #{tpu_custom_call.1} parent=11 // pred_region
        _
      $region28: #{tpu_custom_call.1} parent=11 // pred_fallthru
        _
      // Predicated region
      $region29: #{tpu_custom_call.1} parent=11 // pred_check
        %p278 = pneg %p147
      $region30: #{tpu_custom_call.1} parent=11 // pred_check_branch
        %280 = sbr.rel (%p278) target = $region32
      $region31: #{tpu_custom_call.1} parent=11 // pred_region
        _
      $region32: #{tpu_custom_call.1} parent=11 // pred_fallthru
        _
    $region12: #{tpu_custom_call.1} parent=5 // pred_fallthru
      _
    %p281 = scmp.lt.s32.totalorder %s16, 2
    // Predicated region
    $region33: #{tpu_custom_call.1} parent=5 // pred_check
      %p282 = pneg %p281
    $region34: #{tpu_custom_call.1} parent=5 // pred_check_branch
      %284 = sbr.rel (%p282) target = $region36
    $region35: #{tpu_custom_call.1} parent=5 // pred_region
      // Predicated region
      $region37: #{tpu_custom_call.1} parent=35 // pred_check
        %p285 = pneg %p36
      $region38: #{tpu_custom_call.1} parent=35 // pred_check_branch
        %287 = sbr.rel (%p285) target = $region40
      $region39: #{tpu_custom_call.1} parent=35 // pred_region
        %s288 = smul.u32 32, %s16
        %p289 = scmp.lt.s32.totalorder %s288, 63
        %s290 = scalar_select %p289, %s288, 63
        %s291 = smul.addr %s290, 4
        %s292 = scalar_lea.vmem %s0, %s291
        %s293 = smul.u32 32, %s16
      $region40: #{tpu_custom_call.1} parent=35 // pred_fallthru
        _
    $region36: #{tpu_custom_call.1} parent=5 // pred_fallthru
      _
    %p294 = scmp.le.s32.totalorder 1, %s16
    %p295 = scmp.lt.s32.totalorder %s16, 3
    %p296 = pnand %p294, %p295
    %p297 = pneg %p296
    // Predicated region
    $region41: #{tpu_custom_call.1} parent=5 // pred_check
      _
    $region42: #{tpu_custom_call.1} parent=5 // pred_check_branch
      %299 = sbr.rel (%p296) target = $region44
    $region43: #{tpu_custom_call.1} parent=5 // pred_region
      %s300 = ssub.s32 %s16, 1
      %s301 = smul.u32 32, %s21
      %p302 = scmp.lt.s32.totalorder %s301, 63
      %s303 = scalar_select %p302, %s301, 63
      %s304 = smul.addr %s303, 4
      %s305 = scalar_lea.vmem %s0, %s304
      %p306 = pneg %p42
      %p307 = pneg %p39
      %p308 = pneg %p63
      %p309 = pneg %p60
      %p310 = pneg %p84
      %p311 = pneg %p81
      %p312 = pneg %p105
      %p313 = pneg %p102
      %p314 = pneg %p126
      %p315 = pneg %p123
      %p316 = pneg %p147
      %p317 = pneg %p144
      %p318 = pneg %p173
      %p319 = pneg %p170
      %s320 = smul.u32 32, %s21
      %p321 = scmp.lt.s32.totalorder %s320, 63
      %s322 = scalar_select %p321, %s320, 63
      %s323 = smul.addr %s322, 4
      %s324 = scalar_lea.vmem %s6, %s323
      %p325 = pneg %p199
      %p326 = pneg %p196
      %s327 = smul.u32 32, %s21
      %p328 = scmp.lt.s32.totalorder %s327, 63
      %s329 = scalar_select %p328, %s327, 63
      %s330 = smul.addr %s329, 4
      %s331 = scalar_lea.vmem %s7, %s330
      %p332 = pneg %p225
      %p333 = pneg %p222
      %s334 = smul.u32 32, %s21
      %p335 = scmp.lt.s32.totalorder %s334, 63
      %s336 = scalar_select %p335, %s334, 63
      %s337 = smul.addr %s336, 8
      %s338 = scalar_lea.vmem %s8, %s337
      %p339 = pneg %p251
      %p340 = pneg %p248
      %s341 = smul.u32 32, %s21
      %p342 = scmp.lt.s32.totalorder %s341, 63
      %s343 = scalar_select %p342, %s341, 63
      %s344 = smul.addr %s343, 8
      %s345 = scalar_lea.vmem %s9, %s344
      %s346 = smul.u32 32, %s21
      %p347 = scmp.lt.s32.totalorder %s346, 63
      %s348 = scalar_select %p347, %s346, 63
      %s349 = smul.addr %s348, 4
      %s350 = scalar_lea.vmem %s0, %s349
      %s351 = smul.u32 32, %s21
      %s352 = smul.u32 32, %s21
      %p353 = scmp.lt.s32.totalorder %s352, 63
      %s354 = scalar_select %p353, %s352, 63
      %s355 = smul.addr %s354, 4
      %s356 = scalar_lea.vmem %s6, %s355
      %s357 = smul.u32 32, %s21
      %s358 = smul.u32 32, %s21
      %p359 = scmp.lt.s32.totalorder %s358, 63
      %s360 = scalar_select %p359, %s358, 63
      %s361 = smul.addr %s360, 4
      %s362 = scalar_lea.vmem %s7, %s361
      %s363 = smul.u32 32, %s21
      %s364 = smul.u32 32, %s21
      %p365 = scmp.lt.s32.totalorder %s364, 63
      %s366 = scalar_select %p365, %s364, 63
      %s367 = smul.addr %s366, 8
      %s368 = scalar_lea.vmem %s8, %s367
      %s369 = smul.u32 32, %s21
      %s370 = smul.u32 32, %s21
      %p371 = scmp.lt.s32.totalorder %s370, 63
      %s372 = scalar_select %p371, %s370, 63
      %s373 = smul.addr %s372, 8
      %s374 = scalar_lea.vmem %s9, %s373
      %s375 = smul.u32 32, %s21
      %v377 = vld [vmem:[%s350] sm:$0xf]
      %v378 = vld [vmem:[%s350 + $0x4] sm:$0xf]
      %v379 = vld [vmem:[%s350 + $0x8] sm:$0xf]
      %v380 = vld [vmem:[%s350 + $0xc] sm:$0xf]
      %v381 = vld [vmem:[%s350 + $0x10] sm:$0xf]
      %v382 = vld [vmem:[%s350 + $0x14] sm:$0xf]
      %v383 = vld [vmem:[%s350 + $0x18] sm:$0xf]
      %v384 = vld [vmem:[%s350 + $0x1c] sm:$0xf]
      %v385 = vld [vmem:[%s350 + $0x20] sm:$0xf]
      %v386 = vld [vmem:[%s350 + $0x24] sm:$0xf]
      %v387 = vld [vmem:[%s350 + $0x28] sm:$0xf]
      %v388 = vld [vmem:[%s350 + $0x2c] sm:$0xf]
      %v389 = vld [vmem:[%s350 + $0x30] sm:$0xf]
      %v390 = vld [vmem:[%s350 + $0x34] sm:$0xf]
      %v391 = vld [vmem:[%s350 + $0x38] sm:$0xf]
      %v392 = vld [vmem:[%s350 + $0x3c] sm:$0xf]
      %v393 = vld [vmem:[%s350 + $0x40] sm:$0xf]
      %v394 = vld [vmem:[%s350 + $0x44] sm:$0xf]
      %v395 = vld [vmem:[%s350 + $0x48] sm:$0xf]
      %v396 = vld [vmem:[%s350 + $0x4c] sm:$0xf]
      %v397 = vld [vmem:[%s350 + $0x50] sm:$0xf]
      %v398 = vld [vmem:[%s350 + $0x54] sm:$0xf]
      %v399 = vld [vmem:[%s350 + $0x58] sm:$0xf]
      %v400 = vld [vmem:[%s350 + $0x5c] sm:$0xf]
      %v401 = vld [vmem:[%s350 + $0x60] sm:$0xf]
      %v402 = vld [vmem:[%s350 + $0x64] sm:$0xf]
      %v403 = vld [vmem:[%s350 + $0x68] sm:$0xf]
      %v404 = vld [vmem:[%s350 + $0x6c] sm:$0xf]
      %v405 = vld [vmem:[%s350 + $0x70] sm:$0xf]
      %v406 = vld [vmem:[%s350 + $0x74] sm:$0xf]
      %v407 = vld [vmem:[%s350 + $0x78] sm:$0xf]
      %v408 = vld [vmem:[%s350 + $0x7c] sm:$0xf]
      %v409 = vld [vmem:[%s1] sm:$0xf]
      %v410 = vld [vmem:[%s1 + $0x4] sm:$0xf]
      %v411 = vld [vmem:[%s1 + $0x8] sm:$0xf]
      %v412 = vld [vmem:[%s1 + $0xc] sm:$0x3]
      %v413 = vld [vmem:[%s2] sm:$0x1]
      %v415 = vlaneseq
      %v416 = vshrl.u32 %v415, 7
      %v417 = vsub.s32 0, %v416
      %v418 = vrot.slane %v413, %v417
      %v452 = vunpack.c.l.b16 %v377
      %v453 = vunpack.c.l.b16 %v378
      %v454 = vunpack.c.l.b16 %v379
      %v455 = vunpack.c.l.b16 %v380
      %v456 = vunpack.c.l.b16 %v381
      %v457 = vunpack.c.l.b16 %v382
      %v458 = vunpack.c.l.b16 %v383
      %v459 = vunpack.c.l.b16 %v384
      %v460 = vunpack.c.l.b16 %v385
      %v461 = vunpack.c.l.b16 %v386
      %v462 = vunpack.c.l.b16 %v387
      %v463 = vunpack.c.l.b16 %v388
      %v464 = vunpack.c.l.b16 %v389
      %v465 = vunpack.c.l.b16 %v390
      %v466 = vunpack.c.l.b16 %v391
      %v467 = vunpack.c.l.b16 %v392
      %v468 = vunpack.c.l.b16 %v393
      %v469 = vunpack.c.l.b16 %v394
      %v470 = vunpack.c.l.b16 %v395
      %v471 = vunpack.c.l.b16 %v396
      %v472 = vunpack.c.l.b16 %v397
      %v473 = vunpack.c.l.b16 %v398
      %v474 = vunpack.c.l.b16 %v399
      %v475 = vunpack.c.l.b16 %v400
      %v476 = vunpack.c.l.b16 %v401
      %v477 = vunpack.c.l.b16 %v402
      %v478 = vunpack.c.l.b16 %v403
      %v479 = vunpack.c.l.b16 %v404
      %v480 = vunpack.c.l.b16 %v405
      %v481 = vunpack.c.l.b16 %v406
      %v482 = vunpack.c.l.b16 %v407
      %v483 = vunpack.c.l.b16 %v408
      %v484 = vpack.c.b16 %v453, %v452
      %v485 = vpack.c.b16 %v455, %v454
      %v486 = vpack.c.b16 %v457, %v456
      %v487 = vpack.c.b16 %v459, %v458
      %v488 = vpack.c.b16 %v461, %v460
      %v489 = vpack.c.b16 %v463, %v462
      %v490 = vpack.c.b16 %v465, %v464
      %v491 = vpack.c.b16 %v467, %v466
      %v492 = vpack.c.b16 %v469, %v468
      %v493 = vpack.c.b16 %v471, %v470
      %v494 = vpack.c.b16 %v473, %v472
      %v495 = vpack.c.b16 %v475, %v474
      %v496 = vpack.c.b16 %v477, %v476
      %v497 = vpack.c.b16 %v479, %v478
      %v498 = vpack.c.b16 %v481, %v480
      %v499 = vpack.c.b16 %v483, %v482
      %v504 = vunpack.c.l.b16 %v409
      %v505 = vunpack.c.l.b16 %v410
      %v506 = vunpack.c.l.b16 %v411
      %v507 = vunpack.c.l.b16 %v412
      %v508 = vpack.c.b16 %v505, %v504
      %v509 = vpack.c.b16 %v507, %v506
      %vm511 = vcmask 220160
      %v513 = vsel %vm511, %v484, 0
      %v516 = vsel %vm511, %v485, 0
      %v519 = vsel %vm511, %v486, 0
      %v522 = vsel %vm511, %v487, 0
      %v525 = vsel %vm511, %v488, 0
      %v528 = vsel %vm511, %v489, 0
      %v531 = vsel %vm511, %v490, 0
      %v534 = vsel %vm511, %v491, 0
      %v537 = vsel %vm511, %v492, 0
      %v540 = vsel %vm511, %v493, 0
      %v543 = vsel %vm511, %v494, 0
      %v546 = vsel %vm511, %v495, 0
      %v549 = vsel %vm511, %v496, 0
      %v552 = vsel %vm511, %v497, 0
      %v555 = vsel %vm511, %v498, 0
      %v558 = vsel %vm511, %v499, 0
      %vm560 = vcmask 1044480
      %vm561 = vcmask 1045504
      %v562 = vsel %vm560, 4294967295, 65535
      %v563 = vsel %vm561, %v562, 0
      %v565 = vand.u32 %v509, %v563
      %567 = vmatprep.subr.bf16.mxu0 0
      %568 = vmatpush1.bf16.msra.mxu0 %v508
      %569 = vmatprep.subr.bf16.mxu0 0
      %570 = vmatpush1.bf16.msra.mxu0 %v565
      %571 = vmatprep.subr.bf16.mxu0 0
      %572 = vmatpush1.bf16.msra.mxu0 0
      %573 = vmatprep.subr.bf16.mxu0 0
      %574 = vmatpush1.bf16.msra.mxu0 0
      %575 = vmatprep.subr.bf16.mxu0 0
      %576 = vmatpush1.bf16.msra.mxu0 0
      %577 = vmatprep.subr.bf16.mxu0 0
      %578 = vmatpush1.bf16.msra.mxu0 0
      %579 = vmatprep.subr.bf16.mxu0 0
      %580 = vmatpush1.bf16.msra.mxu0 0
      %581 = vmatprep.subr.bf16.mxu0 0
      %582 = vmatpush1.bf16.msra.mxu0 0
      %583 = vmatprep.subr.bf16.mxu0 0
      %584 = vmatpush1.bf16.msra.mxu0 0
      %585 = vmatprep.subr.bf16.mxu0 0
      %586 = vmatpush1.bf16.msra.mxu0 0
      %587 = vmatprep.subr.bf16.mxu0 0
      %588 = vmatpush1.bf16.msra.mxu0 0
      %589 = vmatprep.subr.bf16.mxu0 0
      %590 = vmatpush1.bf16.msra.mxu0 0
      %591 = vmatprep.subr.bf16.mxu0 0
      %592 = vmatpush1.bf16.msra.mxu0 0
      %593 = vmatprep.subr.bf16.mxu0 0
      %594 = vmatpush1.bf16.msra.mxu0 0
      %595 = vmatprep.subr.bf16.mxu0 0
      %596 = vmatpush1.bf16.msra.mxu0 0
      %597 = vmatprep.subr.bf16.mxu0 0
      %598 = vmatpush1.bf16.msra.mxu0 0
      %599 = vmatprep.mubr.bf16.mxu0 0
      %600 = vmatmul.mubr.bf16.gmra.mrb[0].mxu0 %v513
      %v601 = vpop.f32.mrb[0].mxu0
      %v602 = vadd.f32 %v418, %v601
      %v603 = vpop.f32.mrb[0].mxu0
      %v604 = vpop.f32.mrb[0].mxu0
      %v605 = vadd.f32 %v418, %v604
      %v606 = vpop.f32.mrb[0].mxu0
      %607 = vmatprep.mubr.bf16.mxu0 0
      %608 = vmatmul.mubr.bf16.gmra.mrb[0].mxu0 %v516
      %v609 = vpop.f32.mrb[0].mxu0
      %v610 = vadd.f32 %v418, %v609
      %v611 = vpop.f32.mrb[0].mxu0
      %v612 = vpop.f32.mrb[0].mxu0
      %v613 = vadd.f32 %v418, %v612
      %v614 = vpop.f32.mrb[0].mxu0
      %615 = vmatprep.mubr.bf16.mxu0 0
      %616 = vmatmul.mubr.bf16.gmra.mrb[0].mxu0 %v519
      %v617 = vpop.f32.mrb[0].mxu0
      %v618 = vadd.f32 %v418, %v617
      %v619 = vpop.f32.mrb[0].mxu0
      %v620 = vpop.f32.mrb[0].mxu0
      %v621 = vadd.f32 %v418, %v620
      %v622 = vpop.f32.mrb[0].mxu0
      %623 = vmatprep.mubr.bf16.mxu0 0
      %624 = vmatmul.mubr.bf16.gmra.mrb[0].mxu0 %v522
      %v625 = vpop.f32.mrb[0].mxu0
      %v626 = vadd.f32 %v418, %v625
      %v627 = vpop.f32.mrb[0].mxu0
      %v628 = vpop.f32.mrb[0].mxu0
      %v629 = vadd.f32 %v418, %v628
      %v630 = vpop.f32.mrb[0].mxu0
      %631 = vmatprep.mubr.bf16.mxu0 0
      %632 = vmatmul.mubr.bf16.gmra.mrb[0].mxu0 %v525
      %v633 = vpop.f32.mrb[0].mxu0
      %v634 = vadd.f32 %v418, %v633
      %v635 = vpop.f32.mrb[0].mxu0
      %v636 = vpop.f32.mrb[0].mxu0
      %v637 = vadd.f32 %v418, %v636
      %v638 = vpop.f32.mrb[0].mxu0
      %639 = vmatprep.mubr.bf16.mxu0 0
      %640 = vmatmul.mubr.bf16.gmra.mrb[0].mxu0 %v528
      %v641 = vpop.f32.mrb[0].mxu0
      %v642 = vadd.f32 %v418, %v641
      %v643 = vpop.f32.mrb[0].mxu0
      %v644 = vpop.f32.mrb[0].mxu0
      %v645 = vadd.f32 %v418, %v644
      %v646 = vpop.f32.mrb[0].mxu0
      %647 = vmatprep.mubr.bf16.mxu0 0
      %648 = vmatmul.mubr.bf16.gmra.mrb[0].mxu0 %v531
      %v649 = vpop.f32.mrb[0].mxu0
      %v650 = vadd.f32 %v418, %v649
      %v651 = vpop.f32.mrb[0].mxu0
      %v652 = vpop.f32.mrb[0].mxu0
      %v653 = vadd.f32 %v418, %v652
      %v654 = vpop.f32.mrb[0].mxu0
      %655 = vmatprep.mubr.bf16.mxu0 0
      %656 = vmatmul.mubr.bf16.gmra.mrb[0].mxu0 %v534
      %v657 = vpop.f32.mrb[0].mxu0
      %v658 = vadd.f32 %v418, %v657
      %v659 = vpop.f32.mrb[0].mxu0
      %v660 = vpop.f32.mrb[0].mxu0
      %v661 = vadd.f32 %v418, %v660
      %v662 = vpop.f32.mrb[0].mxu0
      %663 = vmatprep.mubr.bf16.mxu0 0
      %664 = vmatmul.mubr.bf16.gmra.mrb[0].mxu0 %v537
      %v665 = vpop.f32.mrb[0].mxu0
      %v666 = vadd.f32 %v418, %v665
      %v667 = vpop.f32.mrb[0].mxu0
      %v668 = vpop.f32.mrb[0].mxu0
      %v669 = vadd.f32 %v418, %v668
      %v670 = vpop.f32.mrb[0].mxu0
      %671 = vmatprep.mubr.bf16.mxu0 0
      %672 = vmatmul.mubr.bf16.gmra.mrb[0].mxu0 %v540
      %v673 = vpop.f32.mrb[0].mxu0
      %v674 = vadd.f32 %v418, %v673
      %v675 = vpop.f32.mrb[0].mxu0
      %v676 = vpop.f32.mrb[0].mxu0
      %v677 = vadd.f32 %v418, %v676
      %v678 = vpop.f32.mrb[0].mxu0
      %679 = vmatprep.mubr.bf16.mxu0 0
      %680 = vmatmul.mubr.bf16.gmra.mrb[0].mxu0 %v543
      %v681 = vpop.f32.mrb[0].mxu0
      %v682 = vadd.f32 %v418, %v681
      %v683 = vpop.f32.mrb[0].mxu0
      %v684 = vpop.f32.mrb[0].mxu0
      %v685 = vadd.f32 %v418, %v684
      %v686 = vpop.f32.mrb[0].mxu0
      %687 = vmatprep.mubr.bf16.mxu0 0
      %688 = vmatmul.mubr.bf16.gmra.mrb[0].mxu0 %v546
      %v689 = vpop.f32.mrb[0].mxu0
      %v690 = vadd.f32 %v418, %v689
      %v691 = vpop.f32.mrb[0].mxu0
      %v692 = vpop.f32.mrb[0].mxu0
      %v693 = vadd.f32 %v418, %v692
      %v694 = vpop.f32.mrb[0].mxu0
      %695 = vmatprep.mubr.bf16.mxu0 0
      %696 = vmatmul.mubr.bf16.gmra.mrb[0].mxu0 %v549
      %v697 = vpop.f32.mrb[0].mxu0
      %v698 = vadd.f32 %v418, %v697
      %v699 = vpop.f32.mrb[0].mxu0
      %v700 = vpop.f32.mrb[0].mxu0
      %v701 = vadd.f32 %v418, %v700
      %v702 = vpop.f32.mrb[0].mxu0
      %703 = vmatprep.mubr.bf16.mxu0 0
      %704 = vmatmul.mubr.bf16.gmra.mrb[0].mxu0 %v552
      %v705 = vpop.f32.mrb[0].mxu0
      %v706 = vadd.f32 %v418, %v705
      %v707 = vpop.f32.mrb[0].mxu0
      %v708 = vpop.f32.mrb[0].mxu0
      %v709 = vadd.f32 %v418, %v708
      %v710 = vpop.f32.mrb[0].mxu0
      %711 = vmatprep.mubr.bf16.mxu0 0
      %712 = vmatmul.mubr.bf16.gmra.mrb[0].mxu0 %v555
      %v713 = vpop.f32.mrb[0].mxu0
      %v714 = vadd.f32 %v418, %v713
      %v715 = vpop.f32.mrb[0].mxu0
      %v716 = vpop.f32.mrb[0].mxu0
      %v717 = vadd.f32 %v418, %v716
      %v718 = vpop.f32.mrb[0].mxu0
      %719 = vmatprep.mubr.bf16.mxu0 0
      %720 = vmatmul.mubr.bf16.gmra.mrb[0].mxu0 %v558
      %v721 = vpop.f32.mrb[0].mxu0
      %v722 = vadd.f32 %v418, %v721
      %v723 = vpop.f32.mrb[0].mxu0
      %v724 = vpop.f32.mrb[0].mxu0
      %v725 = vadd.f32 %v418, %v724
      %v726 = vpop.f32.mrb[0].mxu0
      %727 = vdwg.mxu0
      %vm728 = vcmp.gt.f32.partialorder %v602, 0.0
      %vm729 = vcmp.gt.f32.partialorder %v605, 0.0
      %vm730 = vcmp.gt.f32.partialorder %v610, 0.0
      %vm731 = vcmp.gt.f32.partialorder %v613, 0.0
      %vm732 = vcmp.gt.f32.partialorder %v618, 0.0
      %vm733 = vcmp.gt.f32.partialorder %v621, 0.0
      %vm734 = vcmp.gt.f32.partialorder %v626, 0.0
      %vm735 = vcmp.gt.f32.partialorder %v629, 0.0
      %vm736 = vcmp.gt.f32.partialorder %v634, 0.0
      %vm737 = vcmp.gt.f32.partialorder %v637, 0.0
      %vm738 = vcmp.gt.f32.partialorder %v642, 0.0
      %vm739 = vcmp.gt.f32.partialorder %v645, 0.0
      %vm740 = vcmp.gt.f32.partialorder %v650, 0.0
      %vm741 = vcmp.gt.f32.partialorder %v653, 0.0
      %vm742 = vcmp.gt.f32.partialorder %v658, 0.0
      %vm743 = vcmp.gt.f32.partialorder %v661, 0.0
      %vm744 = vcmp.gt.f32.partialorder %v666, 0.0
      %vm745 = vcmp.gt.f32.partialorder %v669, 0.0
      %vm746 = vcmp.gt.f32.partialorder %v674, 0.0
      %vm747 = vcmp.gt.f32.partialorder %v677, 0.0
      %vm748 = vcmp.gt.f32.partialorder %v682, 0.0
      %vm749 = vcmp.gt.f32.partialorder %v685, 0.0
      %vm750 = vcmp.gt.f32.partialorder %v690, 0.0
      %vm751 = vcmp.gt.f32.partialorder %v693, 0.0
      %vm752 = vcmp.gt.f32.partialorder %v698, 0.0
      %vm753 = vcmp.gt.f32.partialorder %v701, 0.0
      %vm754 = vcmp.gt.f32.partialorder %v706, 0.0
      %vm755 = vcmp.gt.f32.partialorder %v709, 0.0
      %vm756 = vcmp.gt.f32.partialorder %v714, 0.0
      %vm757 = vcmp.gt.f32.partialorder %v717, 0.0
      %vm758 = vcmp.gt.f32.partialorder %v722, 0.0
      %vm759 = vcmp.gt.f32.partialorder %v725, 0.0
      %v760 = vmin.f32 %v602, 0.0
      %v761 = vmin.f32 %v605, 0.0
      %v762 = vmin.f32 %v610, 0.0
      %v763 = vmin.f32 %v613, 0.0
      %v764 = vmin.f32 %v618, 0.0
      %v765 = vmin.f32 %v621, 0.0
      %v766 = vmin.f32 %v626, 0.0
      %v767 = vmin.f32 %v629, 0.0
      %v768 = vmin.f32 %v634, 0.0
      %v769 = vmin.f32 %v637, 0.0
      %v770 = vmin.f32 %v642, 0.0
      %v771 = vmin.f32 %v645, 0.0
      %v772 = vmin.f32 %v650, 0.0
      %v773 = vmin.f32 %v653, 0.0
      %v774 = vmin.f32 %v658, 0.0
      %v775 = vmin.f32 %v661, 0.0
      %v776 = vmin.f32 %v666, 0.0
      %v777 = vmin.f32 %v669, 0.0
      %v778 = vmin.f32 %v674, 0.0
      %v779 = vmin.f32 %v677, 0.0
      %v780 = vmin.f32 %v682, 0.0
      %v781 = vmin.f32 %v685, 0.0
      %v782 = vmin.f32 %v690, 0.0
      %v783 = vmin.f32 %v693, 0.0
      %v784 = vmin.f32 %v698, 0.0
      %v785 = vmin.f32 %v701, 0.0
      %v786 = vmin.f32 %v706, 0.0
      %v787 = vmin.f32 %v709, 0.0
      %v788 = vmin.f32 %v714, 0.0
      %v789 = vmin.f32 %v717, 0.0
      %v790 = vmin.f32 %v722, 0.0
      %v791 = vmin.f32 %v725, 0.0
      %v792 = vmul.f32 %v760, 1.442695
      %v793 = vpow.pop %v792
      %v794 = vmul.f32 %v761, 1.442695
      %v795 = vpow.pop %v794
      %v796 = vmul.f32 %v762, 1.442695
      %v797 = vpow.pop %v796
      %v798 = vmul.f32 %v763, 1.442695
      %v799 = vpow.pop %v798
      %v800 = vmul.f32 %v764, 1.442695
      %v801 = vpow.pop %v800
      %v802 = vmul.f32 %v765, 1.442695
      %v803 = vpow.pop %v802
      %v804 = vmul.f32 %v766, 1.442695
      %v805 = vpow.pop %v804
      %v806 = vmul.f32 %v767, 1.442695
      %v807 = vpow.pop %v806
      %v808 = vmul.f32 %v768, 1.442695
      %v809 = vpow.pop %v808
      %v810 = vmul.f32 %v769, 1.442695
      %v811 = vpow.pop %v810
      %v812 = vmul.f32 %v770, 1.442695
      %v813 = vpow.pop %v812
      %v814 = vmul.f32 %v771, 1.442695
      %v815 = vpow.pop %v814
      %v816 = vmul.f32 %v772, 1.442695
      %v817 = vpow.pop %v816
      %v818 = vmul.f32 %v773, 1.442695
      %v819 = vpow.pop %v818
      %v820 = vmul.f32 %v774, 1.442695
      %v821 = vpow.pop %v820
      %v822 = vmul.f32 %v775, 1.442695
      %v823 = vpow.pop %v822
      %v824 = vmul.f32 %v776, 1.442695
      %v825 = vpow.pop %v824
      %v826 = vmul.f32 %v777, 1.442695
      %v827 = vpow.pop %v826
      %v828 = vmul.f32 %v778, 1.442695
      %v829 = vpow.pop %v828
      %v830 = vmul.f32 %v779, 1.442695
      %v831 = vpow.pop %v830
      %v832 = vmul.f32 %v780, 1.442695
      %v833 = vpow.pop %v832
      %v834 = vmul.f32 %v781, 1.442695
      %v835 = vpow.pop %v834
      %v836 = vmul.f32 %v782, 1.442695
      %v837 = vpow.pop %v836
      %v838 = vmul.f32 %v783, 1.442695
      %v839 = vpow.pop %v838
      %v840 = vmul.f32 %v784, 1.442695
      %v841 = vpow.pop %v840
      %v842 = vmul.f32 %v785, 1.442695
      %v843 = vpow.pop %v842
      %v844 = vmul.f32 %v786, 1.442695
      %v845 = vpow.pop %v844
      %v846 = vmul.f32 %v787, 1.442695
      %v847 = vpow.pop %v846
      %v848 = vmul.f32 %v788, 1.442695
      %v849 = vpow.pop %v848
      %v850 = vmul.f32 %v789, 1.442695
      %v851 = vpow.pop %v850
      %v852 = vmul.f32 %v790, 1.442695
      %v853 = vpow.pop %v852
      %v854 = vmul.f32 %v791, 1.442695
      %v855 = vpow.pop %v854
      %v856 = vsub.f32 %v793, 1.0
      %v857 = vsub.f32 %v795, 1.0
      %v858 = vsub.f32 %v797, 1.0
      %v859 = vsub.f32 %v799, 1.0
      %v860 = vsub.f32 %v801, 1.0
      %v861 = vsub.f32 %v803, 1.0
      %v862 = vsub.f32 %v805, 1.0
      %v863 = vsub.f32 %v807, 1.0
      %v864 = vsub.f32 %v809, 1.0
      %v865 = vsub.f32 %v811, 1.0
      %v866 = vsub.f32 %v813, 1.0
      %v867 = vsub.f32 %v815, 1.0
      %v868 = vsub.f32 %v817, 1.0
      %v869 = vsub.f32 %v819, 1.0
      %v870 = vsub.f32 %v821, 1.0
      %v871 = vsub.f32 %v823, 1.0
      %v872 = vsub.f32 %v825, 1.0
      %v873 = vsub.f32 %v827, 1.0
      %v874 = vsub.f32 %v829, 1.0
      %v875 = vsub.f32 %v831, 1.0
      %v876 = vsub.f32 %v833, 1.0
      %v877 = vsub.f32 %v835, 1.0
      %v878 = vsub.f32 %v837, 1.0
      %v879 = vsub.f32 %v839, 1.0
      %v880 = vsub.f32 %v841, 1.0
      %v881 = vsub.f32 %v843, 1.0
      %v882 = vsub.f32 %v845, 1.0
      %v883 = vsub.f32 %v847, 1.0
      %v884 = vsub.f32 %v849, 1.0
      %v885 = vsub.f32 %v851, 1.0
      %v886 = vsub.f32 %v853, 1.0
      %v887 = vsub.f32 %v855, 1.0
      %v888 = vsel %vm728, %v602, %v856
      %v889 = vsel %vm729, %v605, %v857
      %v890 = vsel %vm730, %v610, %v858
      %v891 = vsel %vm731, %v613, %v859
      %v892 = vsel %vm732, %v618, %v860
      %v893 = vsel %vm733, %v621, %v861
      %v894 = vsel %vm734, %v626, %v862
      %v895 = vsel %vm735, %v629, %v863
      %v896 = vsel %vm736, %v634, %v864
      %v897 = vsel %vm737, %v637, %v865
      %v898 = vsel %vm738, %v642, %v866
      %v899 = vsel %vm739, %v645, %v867
      %v900 = vsel %vm740, %v650, %v868
      %v901 = vsel %vm741, %v653, %v869
      %v902 = vsel %vm742, %v658, %v870
      %v903 = vsel %vm743, %v661, %v871
      %v904 = vsel %vm744, %v666, %v872
      %v905 = vsel %vm745, %v669, %v873
      %v906 = vsel %vm746, %v674, %v874
      %v907 = vsel %vm747, %v677, %v875
      %v908 = vsel %vm748, %v682, %v876
      %v909 = vsel %vm749, %v685, %v877
      %v910 = vsel %vm750, %v690, %v878
      %v911 = vsel %vm751, %v693, %v879
      %v912 = vsel %vm752, %v698, %v880
      %v913 = vsel %vm753, %v701, %v881
      %v914 = vsel %vm754, %v706, %v882
      %v915 = vsel %vm755, %v709, %v883
      %v916 = vsel %vm756, %v714, %v884
      %v917 = vsel %vm757, %v717, %v885
      %v918 = vsel %vm758, %v722, %v886
      %v919 = vsel %vm759, %v725, %v887
      %v920 = vpack.c.bf16 %v889, %v888
      %v921 = vpack.c.bf16 %v891, %v890
      %v922 = vpack.c.bf16 %v893, %v892
      %v923 = vpack.c.bf16 %v895, %v894
      %v924 = vpack.c.bf16 %v897, %v896
      %v925 = vpack.c.bf16 %v899, %v898
      %v926 = vpack.c.bf16 %v901, %v900
      %v927 = vpack.c.bf16 %v903, %v902
      %v928 = vpack.c.bf16 %v905, %v904
      %v929 = vpack.c.bf16 %v907, %v906
      %v930 = vpack.c.bf16 %v909, %v908
      %v931 = vpack.c.bf16 %v911, %v910
      %v932 = vpack.c.bf16 %v913, %v912
      %v933 = vpack.c.bf16 %v915, %v914
      %v934 = vpack.c.bf16 %v917, %v916
      %v935 = vpack.c.bf16 %v919, %v918
      %v936 = vld [vmem:[%s3] sm:$0xf]
      %v937 = vld [vmem:[%s3 + $0x4] sm:$0xf]
      %v938 = vld [vmem:[%s3 + $0x8] sm:$0xf]
      %v939 = vld [vmem:[%s3 + $0xc] sm:$0xf]
      %v940 = vld [vmem:[%s4] sm:$0x1]
      %v942 = vlaneseq
      %v943 = vshrl.u32 %v942, 7
      %v944 = vsub.s32 0, %v943
      %v945 = vrot.slane %v940, %v944
      %v951 = vunpack.c.l.b16 %v936
      %v952 = vunpack.c.l.b16 %v937
      %v953 = vunpack.c.l.b16 %v938
      %v954 = vunpack.c.l.b16 %v939
      %v955 = vpack.c.b16 %v952, %v951
      %v956 = vpack.c.b16 %v954, %v953
      %vm959 = vcmask 261120
      %v961 = vsel %vm959, %v920, 0
      %v964 = vsel %vm959, %v921, 0
      %v967 = vsel %vm959, %v922, 0
      %v970 = vsel %vm959, %v923, 0
      %v973 = vsel %vm959, %v924, 0
      %v976 = vsel %vm959, %v925, 0
      %v979 = vsel %vm959, %v926, 0
      %v982 = vsel %vm959, %v927, 0
      %v985 = vsel %vm959, %v928, 0
      %v988 = vsel %vm959, %v929, 0
      %v991 = vsel %vm959, %v930, 0
      %v994 = vsel %vm959, %v931, 0
      %v997 = vsel %vm959, %v932, 0
      %v1000 = vsel %vm959, %v933, 0
      %v1003 = vsel %vm959, %v934, 0
      %v1006 = vsel %vm959, %v935, 0
      %1008 = vmatprep.subr.bf16.mxu0 0
      %1009 = vmatpush1.bf16.msra.mxu0 %v955
      %1010 = vmatprep.subr.bf16.mxu0 0
      %1011 = vmatpush1.bf16.msra.mxu0 %v956
      %1012 = vmatprep.subr.bf16.mxu0 0
      %1013 = vmatpush1.bf16.msra.mxu0 0
      %1014 = vmatprep.subr.bf16.mxu0 0
      %1015 = vmatpush1.bf16.msra.mxu0 0
      %1016 = vmatprep.subr.bf16.mxu0 0
      %1017 = vmatpush1.bf16.msra.mxu0 0
      %1018 = vmatprep.subr.bf16.mxu0 0
      %1019 = vmatpush1.bf16.msra.mxu0 0
      %1020 = vmatprep.subr.bf16.mxu0 0
      %1021 = vmatpush1.bf16.msra.mxu0 0
      %1022 = vmatprep.subr.bf16.mxu0 0
      %1023 = vmatpush1.bf16.msra.mxu0 0
      %1024 = vmatprep.subr.bf16.mxu0 0
      %1025 = vmatpush1.bf16.msra.mxu0 0
      %1026 = vmatprep.subr.bf16.mxu0 0
      %1027 = vmatpush1.bf16.msra.mxu0 0
      %1028 = vmatprep.subr.bf16.mxu0 0
      %1029 = vmatpush1.bf16.msra.mxu0 0
      %1030 = vmatprep.subr.bf16.mxu0 0
      %1031 = vmatpush1.bf16.msra.mxu0 0
      %1032 = vmatprep.subr.bf16.mxu0 0
      %1033 = vmatpush1.bf16.msra.mxu0 0
      %1034 = vmatprep.subr.bf16.mxu0 0
      %1035 = vmatpush1.bf16.msra.mxu0 0
      %1036 = vmatprep.subr.bf16.mxu0 0
      %1037 = vmatpush1.bf16.msra.mxu0 0
      %1038 = vmatprep.subr.bf16.mxu0 0
      %1039 = vmatpush1.bf16.msra.mxu0 0
      %1040 = vmatprep.mubr.bf16.mxu0 0
      %1041 = vmatmul.mubr.bf16.gmra.mrb[0].mxu0 %v961
      %v1042 = vpop.f32.mrb[0].mxu0
      %v1043 = vadd.f32 %v945, %v1042
      %v1044 = vpop.f32.mrb[0].mxu0
      %v1045 = vpop.f32.mrb[0].mxu0
      %v1046 = vadd.f32 %v945, %v1045
      %v1047 = vpop.f32.mrb[0].mxu0
      %1048 = vmatprep.mubr.bf16.mxu0 0
      %1049 = vmatmul.mubr.bf16.gmra.mrb[0].mxu0 %v964
      %v1050 = vpop.f32.mrb[0].mxu0
      %v1051 = vadd.f32 %v945, %v1050
      %v1052 = vpop.f32.mrb[0].mxu0
      %v1053 = vpop.f32.mrb[0].mxu0
      %v1054 = vadd.f32 %v945, %v1053
      %v1055 = vpop.f32.mrb[0].mxu0
      %1056 = vmatprep.mubr.bf16.mxu0 0
      %1057 = vmatmul.mubr.bf16.gmra.mrb[0].mxu0 %v967
      %v1058 = vpop.f32.mrb[0].mxu0
      %v1059 = vadd.f32 %v945, %v1058
      %v1060 = vpop.f32.mrb[0].mxu0
      %v1061 = vpop.f32.mrb[0].mxu0
      %v1062 = vadd.f32 %v945, %v1061
      %v1063 = vpop.f32.mrb[0].mxu0
      %1064 = vmatprep.mubr.bf16.mxu0 0
      %1065 = vmatmul.mubr.bf16.gmra.mrb[0].mxu0 %v970
      %v1066 = vpop.f32.mrb[0].mxu0
      %v1067 = vadd.f32 %v945, %v1066
      %v1068 = vpop.f32.mrb[0].mxu0
      %v1069 = vpop.f32.mrb[0].mxu0
      %v1070 = vadd.f32 %v945, %v1069
      %v1071 = vpop.f32.mrb[0].mxu0
      %1072 = vmatprep.mubr.bf16.mxu0 0
      %1073 = vmatmul.mubr.bf16.gmra.mrb[0].mxu0 %v973
      %v1074 = vpop.f32.mrb[0].mxu0
      %v1075 = vadd.f32 %v945, %v1074
      %v1076 = vpop.f32.mrb[0].mxu0
      %v1077 = vpop.f32.mrb[0].mxu0
      %v1078 = vadd.f32 %v945, %v1077
      %v1079 = vpop.f32.mrb[0].mxu0
      %1080 = vmatprep.mubr.bf16.mxu0 0
      %1081 = vmatmul.mubr.bf16.gmra.mrb[0].mxu0 %v976
      %v1082 = vpop.f32.mrb[0].mxu0
      %v1083 = vadd.f32 %v945, %v1082
      %v1084 = vpop.f32.mrb[0].mxu0
      %v1085 = vpop.f32.mrb[0].mxu0
      %v1086 = vadd.f32 %v945, %v1085
      %v1087 = vpop.f32.mrb[0].mxu0
      %1088 = vmatprep.mubr.bf16.mxu0 0
      %1089 = vmatmul.mubr.bf16.gmra.mrb[0].mxu0 %v979
      %v1090 = vpop.f32.mrb[0].mxu0
      %v1091 = vadd.f32 %v945, %v1090
      %v1092 = vpop.f32.mrb[0].mxu0
      %v1093 = vpop.f32.mrb[0].mxu0
      %v1094 = vadd.f32 %v945, %v1093
      %v1095 = vpop.f32.mrb[0].mxu0
      %1096 = vmatprep.mubr.bf16.mxu0 0
      %1097 = vmatmul.mubr.bf16.gmra.mrb[0].mxu0 %v982
      %v1098 = vpop.f32.mrb[0].mxu0
      %v1099 = vadd.f32 %v945, %v1098
      %v1100 = vpop.f32.mrb[0].mxu0
      %v1101 = vpop.f32.mrb[0].mxu0
      %v1102 = vadd.f32 %v945, %v1101
      %v1103 = vpop.f32.mrb[0].mxu0
      %1104 = vmatprep.mubr.bf16.mxu0 0
      %1105 = vmatmul.mubr.bf16.gmra.mrb[0].mxu0 %v985
      %v1106 = vpop.f32.mrb[0].mxu0
      %v1107 = vadd.f32 %v945, %v1106
      %v1108 = vpop.f32.mrb[0].mxu0
      %v1109 = vpop.f32.mrb[0].mxu0
      %v1110 = vadd.f32 %v945, %v1109
      %v1111 = vpop.f32.mrb[0].mxu0
      %1112 = vmatprep.mubr.bf16.mxu0 0
      %1113 = vmatmul.mubr.bf16.gmra.mrb[0].mxu0 %v988
      %v1114 = vpop.f32.mrb[0].mxu0
      %v1115 = vadd.f32 %v945, %v1114
      %v1116 = vpop.f32.mrb[0].mxu0
      %v1117 = vpop.f32.mrb[0].mxu0
      %v1118 = vadd.f32 %v945, %v1117
      %v1119 = vpop.f32.mrb[0].mxu0
      %1120 = vmatprep.mubr.bf16.mxu0 0
      %1121 = vmatmul.mubr.bf16.gmra.mrb[0].mxu0 %v991
      %v1122 = vpop.f32.mrb[0].mxu0
      %v1123 = vadd.f32 %v945, %v1122
      %v1124 = vpop.f32.mrb[0].mxu0
      %v1125 = vpop.f32.mrb[0].mxu0
      %v1126 = vadd.f32 %v945, %v1125
      %v1127 = vpop.f32.mrb[0].mxu0
      %1128 = vmatprep.mubr.bf16.mxu0 0
      %1129 = vmatmul.mubr.bf16.gmra.mrb[0].mxu0 %v994
      %v1130 = vpop.f32.mrb[0].mxu0
      %v1131 = vadd.f32 %v945, %v1130
      %v1132 = vpop.f32.mrb[0].mxu0
      %v1133 = vpop.f32.mrb[0].mxu0
      %v1134 = vadd.f32 %v945, %v1133
      %v1135 = vpop.f32.mrb[0].mxu0
      %1136 = vmatprep.mubr.bf16.mxu0 0
      %1137 = vmatmul.mubr.bf16.gmra.mrb[0].mxu0 %v997
      %v1138 = vpop.f32.mrb[0].mxu0
      %v1139 = vadd.f32 %v945, %v1138
      %v1140 = vpop.f32.mrb[0].mxu0
      %v1141 = vpop.f32.mrb[0].mxu0
      %v1142 = vadd.f32 %v945, %v1141
      %v1143 = vpop.f32.mrb[0].mxu0
      %1144 = vmatprep.mubr.bf16.mxu0 0
      %1145 = vmatmul.mubr.bf16.gmra.mrb[0].mxu0 %v1000
      %v1146 = vpop.f32.mrb[0].mxu0
      %v1147 = vadd.f32 %v945, %v1146
      %v1148 = vpop.f32.mrb[0].mxu0
      %v1149 = vpop.f32.mrb[0].mxu0
      %v1150 = vadd.f32 %v945, %v1149
      %v1151 = vpop.f32.mrb[0].mxu0
      %1152 = vmatprep.mubr.bf16.mxu0 0
      %1153 = vmatmul.mubr.bf16.gmra.mrb[0].mxu0 %v1003
      %v1154 = vpop.f32.mrb[0].mxu0
      %v1155 = vadd.f32 %v945, %v1154
      %v1156 = vpop.f32.mrb[0].mxu0
      %v1157 = vpop.f32.mrb[0].mxu0
      %v1158 = vadd.f32 %v945, %v1157
      %v1159 = vpop.f32.mrb[0].mxu0
      %1160 = vmatprep.mubr.bf16.mxu0 0
      %1161 = vmatmul.mubr.bf16.gmra.mrb[0].mxu0 %v1006
      %v1162 = vpop.f32.mrb[0].mxu0
      %v1163 = vadd.f32 %v945, %v1162
      %v1164 = vpop.f32.mrb[0].mxu0
      %v1165 = vpop.f32.mrb[0].mxu0
      %v1166 = vadd.f32 %v945, %v1165
      %v1167 = vpop.f32.mrb[0].mxu0
      %1168 = vdwg.mxu0
      %v1169 = vpack.c.bf16 %v1046, %v1043
      %v1170 = vpack.c.bf16 %v1054, %v1051
      %v1171 = vpack.c.bf16 %v1062, %v1059
      %v1172 = vpack.c.bf16 %v1070, %v1067
      %v1173 = vpack.c.bf16 %v1078, %v1075
      %v1174 = vpack.c.bf16 %v1086, %v1083
      %v1175 = vpack.c.bf16 %v1094, %v1091
      %v1176 = vpack.c.bf16 %v1102, %v1099
      %v1177 = vpack.c.bf16 %v1110, %v1107
      %v1178 = vpack.c.bf16 %v1118, %v1115
      %v1179 = vpack.c.bf16 %v1126, %v1123
      %v1180 = vpack.c.bf16 %v1134, %v1131
      %v1181 = vpack.c.bf16 %v1142, %v1139
      %v1182 = vpack.c.bf16 %v1150, %v1147
      %v1183 = vpack.c.bf16 %v1158, %v1155
      %v1184 = vpack.c.bf16 %v1166, %v1163
      %v1201 = vunpack.c.l.b16 %v1169
      %v1202 = vunpack.c.h.b16 %v1169
      %v1203 = vunpack.c.l.b16 %v1170
      %v1204 = vunpack.c.h.b16 %v1170
      %v1205 = vunpack.c.l.b16 %v1171
      %v1206 = vunpack.c.h.b16 %v1171
      %v1207 = vunpack.c.l.b16 %v1172
      %v1208 = vunpack.c.h.b16 %v1172
      %v1209 = vunpack.c.l.b16 %v1173
      %v1210 = vunpack.c.h.b16 %v1173
      %v1211 = vunpack.c.l.b16 %v1174
      %v1212 = vunpack.c.h.b16 %v1174
      %v1213 = vunpack.c.l.b16 %v1175
      %v1214 = vunpack.c.h.b16 %v1175
      %v1215 = vunpack.c.l.b16 %v1176
      %v1216 = vunpack.c.h.b16 %v1176
      %v1217 = vunpack.c.l.b16 %v1177
      %v1218 = vunpack.c.h.b16 %v1177
      %v1219 = vunpack.c.l.b16 %v1178
      %v1220 = vunpack.c.h.b16 %v1178
      %v1221 = vunpack.c.l.b16 %v1179
      %v1222 = vunpack.c.h.b16 %v1179
      %v1223 = vunpack.c.l.b16 %v1180
      %v1224 = vunpack.c.h.b16 %v1180
      %v1225 = vunpack.c.l.b16 %v1181
      %v1226 = vunpack.c.h.b16 %v1181
      %v1227 = vunpack.c.l.b16 %v1182
      %v1228 = vunpack.c.h.b16 %v1182
      %v1229 = vunpack.c.l.b16 %v1183
      %v1230 = vunpack.c.h.b16 %v1183
      %v1231 = vunpack.c.l.b16 %v1184
      %v1232 = vunpack.c.h.b16 %v1184
      %v1233 = vpack.c.b16 %v1201, %v1201
      %v1234 = vpack.c.b16 %v1202, %v1202
      %v1235 = vpack.c.b16 %v1203, %v1203
      %v1236 = vpack.c.b16 %v1204, %v1204
      %v1237 = vpack.c.b16 %v1205, %v1205
      %v1238 = vpack.c.b16 %v1206, %v1206
      %v1239 = vpack.c.b16 %v1207, %v1207
      %v1240 = vpack.c.b16 %v1208, %v1208
      %v1241 = vpack.c.b16 %v1209, %v1209
      %v1242 = vpack.c.b16 %v1210, %v1210
      %v1243 = vpack.c.b16 %v1211, %v1211
      %v1244 = vpack.c.b16 %v1212, %v1212
      %v1245 = vpack.c.b16 %v1213, %v1213
      %v1246 = vpack.c.b16 %v1214, %v1214
      %v1247 = vpack.c.b16 %v1215, %v1215
      %v1248 = vpack.c.b16 %v1216, %v1216
      %v1249 = vpack.c.b16 %v1217, %v1217
      %v1250 = vpack.c.b16 %v1218, %v1218
      %v1251 = vpack.c.b16 %v1219, %v1219
      %v1252 = vpack.c.b16 %v1220, %v1220
      %v1253 = vpack.c.b16 %v1221, %v1221
      %v1254 = vpack.c.b16 %v1222, %v1222
      %v1255 = vpack.c.b16 %v1223, %v1223
      %v1256 = vpack.c.b16 %v1224, %v1224
      %v1257 = vpack.c.b16 %v1225, %v1225
      %v1258 = vpack.c.b16 %v1226, %v1226
      %v1259 = vpack.c.b16 %v1227, %v1227
      %v1260 = vpack.c.b16 %v1228, %v1228
      %v1261 = vpack.c.b16 %v1229, %v1229
      %v1262 = vpack.c.b16 %v1230, %v1230
      %v1263 = vpack.c.b16 %v1231, %v1231
      %v1264 = vpack.c.b16 %v1232, %v1232
      %vm1297 = vcmask 257024
      %1298 = vst.msk [vmem:[%s356] sm:$0xf] %vm1297, %v1233
      %1299 = vst.msk [vmem:[%s356 + $0x4] sm:$0xf] %vm1297, %v1234
      %1300 = vst.msk [vmem:[%s356 + $0x8] sm:$0xf] %vm1297, %v1235
      %1301 = vst.msk [vmem:[%s356 + $0xc] sm:$0xf] %vm1297, %v1236
      %1302 = vst.msk [vmem:[%s356 + $0x10] sm:$0xf] %vm1297, %v1237
      %1303 = vst.msk [vmem:[%s356 + $0x14] sm:$0xf] %vm1297, %v1238
      %1304 = vst.msk [vmem:[%s356 + $0x18] sm:$0xf] %vm1297, %v1239
      %1305 = vst.msk [vmem:[%s356 + $0x1c] sm:$0xf] %vm1297, %v1240
      %1306 = vst.msk [vmem:[%s356 + $0x20] sm:$0xf] %vm1297, %v1241
      %1307 = vst.msk [vmem:[%s356 + $0x24] sm:$0xf] %vm1297, %v1242
      %1308 = vst.msk [vmem:[%s356 + $0x28] sm:$0xf] %vm1297, %v1243
      %1309 = vst.msk [vmem:[%s356 + $0x2c] sm:$0xf] %vm1297, %v1244
      %1310 = vst.msk [vmem:[%s356 + $0x30] sm:$0xf] %vm1297, %v1245
      %1311 = vst.msk [vmem:[%s356 + $0x34] sm:$0xf] %vm1297, %v1246
      %1312 = vst.msk [vmem:[%s356 + $0x38] sm:$0xf] %vm1297, %v1247
      %1313 = vst.msk [vmem:[%s356 + $0x3c] sm:$0xf] %vm1297, %v1248
      %1314 = vst.msk [vmem:[%s356 + $0x40] sm:$0xf] %vm1297, %v1249
      %1315 = vst.msk [vmem:[%s356 + $0x44] sm:$0xf] %vm1297, %v1250
      %1316 = vst.msk [vmem:[%s356 + $0x48] sm:$0xf] %vm1297, %v1251
      %1317 = vst.msk [vmem:[%s356 + $0x4c] sm:$0xf] %vm1297, %v1252
      %1318 = vst.msk [vmem:[%s356 + $0x50] sm:$0xf] %vm1297, %v1253
      %1319 = vst.msk [vmem:[%s356 + $0x54] sm:$0xf] %vm1297, %v1254
      %1320 = vst.msk [vmem:[%s356 + $0x58] sm:$0xf] %vm1297, %v1255
      %1321 = vst.msk [vmem:[%s356 + $0x5c] sm:$0xf] %vm1297, %v1256
      %1322 = vst.msk [vmem:[%s356 + $0x60] sm:$0xf] %vm1297, %v1257
      %1323 = vst.msk [vmem:[%s356 + $0x64] sm:$0xf] %vm1297, %v1258
      %1324 = vst.msk [vmem:[%s356 + $0x68] sm:$0xf] %vm1297, %v1259
      %1325 = vst.msk [vmem:[%s356 + $0x6c] sm:$0xf] %vm1297, %v1260
      %1326 = vst.msk [vmem:[%s356 + $0x70] sm:$0xf] %vm1297, %v1261
      %1327 = vst.msk [vmem:[%s356 + $0x74] sm:$0xf] %vm1297, %v1262
      %1328 = vst.msk [vmem:[%s356 + $0x78] sm:$0xf] %vm1297, %v1263
      %1329 = vst.msk [vmem:[%s356 + $0x7c] sm:$0xf] %vm1297, %v1264
      %v1330 = vsel %vm959, %v1043, -inf
      %1331 = vmax.xlane.f32.xlu0 %v1330
      %v1332 = vpop.xlane.xlu0 %1331
      %v1333 = vsel %vm959, %v1046, -inf
      %1334 = vmax.xlane.f32.xlu0 %v1333
      %v1335 = vpop.xlane.xlu0 %1334
      %v1336 = vsel %vm959, %v1051, -inf
      %1337 = vmax.xlane.f32.xlu0 %v1336
      %v1338 = vpop.xlane.xlu0 %1337
      %v1339 = vsel %vm959, %v1054, -inf
      %1340 = vmax.xlane.f32.xlu0 %v1339
      %v1341 = vpop.xlane.xlu0 %1340
      %v1342 = vsel %vm959, %v1059, -inf
      %1343 = vmax.xlane.f32.xlu0 %v1342
      %v1344 = vpop.xlane.xlu0 %1343
      %v1345 = vsel %vm959, %v1062, -inf
      %1346 = vmax.xlane.f32.xlu0 %v1345
      %v1347 = vpop.xlane.xlu0 %1346
      %v1348 = vsel %vm959, %v1067, -inf
      %1349 = vmax.xlane.f32.xlu0 %v1348
      %v1350 = vpop.xlane.xlu0 %1349
      %v1351 = vsel %vm959, %v1070, -inf
      %1352 = vmax.xlane.f32.xlu0 %v1351
      %v1353 = vpop.xlane.xlu0 %1352
      %v1354 = vsel %vm959, %v1075, -inf
      %1355 = vmax.xlane.f32.xlu0 %v1354
      %v1356 = vpop.xlane.xlu0 %1355
      %v1357 = vsel %vm959, %v1078, -inf
      %1358 = vmax.xlane.f32.xlu0 %v1357
      %v1359 = vpop.xlane.xlu0 %1358
      %v1360 = vsel %vm959, %v1083, -inf
      %1361 = vmax.xlane.f32.xlu0 %v1360
      %v1362 = vpop.xlane.xlu0 %1361
      %v1363 = vsel %vm959, %v1086, -inf
      %1364 = vmax.xlane.f32.xlu0 %v1363
      %v1365 = vpop.xlane.xlu0 %1364
      %v1366 = vsel %vm959, %v1091, -inf
      %1367 = vmax.xlane.f32.xlu0 %v1366
      %v1368 = vpop.xlane.xlu0 %1367
      %v1369 = vsel %vm959, %v1094, -inf
      %1370 = vmax.xlane.f32.xlu0 %v1369
      %v1371 = vpop.xlane.xlu0 %1370
      %v1372 = vsel %vm959, %v1099, -inf
      %1373 = vmax.xlane.f32.xlu0 %v1372
      %v1374 = vpop.xlane.xlu0 %1373
      %v1375 = vsel %vm959, %v1102, -inf
      %1376 = vmax.xlane.f32.xlu0 %v1375
      %v1377 = vpop.xlane.xlu0 %1376
      %v1378 = vsel %vm959, %v1107, -inf
      %1379 = vmax.xlane.f32.xlu0 %v1378
      %v1380 = vpop.xlane.xlu0 %1379
      %v1381 = vsel %vm959, %v1110, -inf
      %1382 = vmax.xlane.f32.xlu0 %v1381
      %v1383 = vpop.xlane.xlu0 %1382
      %v1384 = vsel %vm959, %v1115, -inf
      %1385 = vmax.xlane.f32.xlu0 %v1384
      %v1386 = vpop.xlane.xlu0 %1385
      %v1387 = vsel %vm959, %v1118, -inf
      %1388 = vmax.xlane.f32.xlu0 %v1387
      %v1389 = vpop.xlane.xlu0 %1388
      %v1390 = vsel %vm959, %v1123, -inf
      %1391 = vmax.xlane.f32.xlu0 %v1390
      %v1392 = vpop.xlane.xlu0 %1391
      %v1393 = vsel %vm959, %v1126, -inf
      %1394 = vmax.xlane.f32.xlu0 %v1393
      %v1395 = vpop.xlane.xlu0 %1394
      %v1396 = vsel %vm959, %v1131, -inf
      %1397 = vmax.xlane.f32.xlu0 %v1396
      %v1398 = vpop.xlane.xlu0 %1397
      %v1399 = vsel %vm959, %v1134, -inf
      %1400 = vmax.xlane.f32.xlu0 %v1399
      %v1401 = vpop.xlane.xlu0 %1400
      %v1402 = vsel %vm959, %v1139, -inf
      %1403 = vmax.xlane.f32.xlu0 %v1402
      %v1404 = vpop.xlane.xlu0 %1403
      %v1405 = vsel %vm959, %v1142, -inf
      %1406 = vmax.xlane.f32.xlu0 %v1405
      %v1407 = vpop.xlane.xlu0 %1406
      %v1408 = vsel %vm959, %v1147, -inf
      %1409 = vmax.xlane.f32.xlu0 %v1408
      %v1410 = vpop.xlane.xlu0 %1409
      %v1411 = vsel %vm959, %v1150, -inf
      %1412 = vmax.xlane.f32.xlu0 %v1411
      %v1413 = vpop.xlane.xlu0 %1412
      %v1414 = vsel %vm959, %v1155, -inf
      %1415 = vmax.xlane.f32.xlu0 %v1414
      %v1416 = vpop.xlane.xlu0 %1415
      %v1417 = vsel %vm959, %v1158, -inf
      %1418 = vmax.xlane.f32.xlu0 %v1417
      %v1419 = vpop.xlane.xlu0 %1418
      %v1420 = vsel %vm959, %v1163, -inf
      %1421 = vmax.xlane.f32.xlu0 %v1420
      %v1422 = vpop.xlane.xlu0 %1421
      %v1423 = vsel %vm959, %v1166, -inf
      %1424 = vmax.xlane.f32.xlu0 %v1423
      %v1425 = vpop.xlane.xlu0 %1424
      %v1426 = vsub.f32 %v1043, %v1332
      %v1427 = vsub.f32 %v1046, %v1335
      %v1428 = vsub.f32 %v1051, %v1338
      %v1429 = vsub.f32 %v1054, %v1341
      %v1430 = vsub.f32 %v1059, %v1344
      %v1431 = vsub.f32 %v1062, %v1347
      %v1432 = vsub.f32 %v1067, %v1350
      %v1433 = vsub.f32 %v1070, %v1353
      %v1434 = vsub.f32 %v1075, %v1356
      %v1435 = vsub.f32 %v1078, %v1359
      %v1436 = vsub.f32 %v1083, %v1362
      %v1437 = vsub.f32 %v1086, %v1365
      %v1438 = vsub.f32 %v1091, %v1368
      %v1439 = vsub.f32 %v1094, %v1371
      %v1440 = vsub.f32 %v1099, %v1374
      %v1441 = vsub.f32 %v1102, %v1377
      %v1442 = vsub.f32 %v1107, %v1380
      %v1443 = vsub.f32 %v1110, %v1383
      %v1444 = vsub.f32 %v1115, %v1386
      %v1445 = vsub.f32 %v1118, %v1389
      %v1446 = vsub.f32 %v1123, %v1392
      %v1447 = vsub.f32 %v1126, %v1395
      %v1448 = vsub.f32 %v1131, %v1398
      %v1449 = vsub.f32 %v1134, %v1401
      %v1450 = vsub.f32 %v1139, %v1404
      %v1451 = vsub.f32 %v1142, %v1407
      %v1452 = vsub.f32 %v1147, %v1410
      %v1453 = vsub.f32 %v1150, %v1413
      %v1454 = vsub.f32 %v1155, %v1416
      %v1455 = vsub.f32 %v1158, %v1419
      %v1456 = vsub.f32 %v1163, %v1422
      %v1457 = vsub.f32 %v1166, %v1425
      %v1458 = vmul.f32 %v1426, 1.442695
      %v1459 = vpow.pop %v1458
      %v1460 = vmul.f32 %v1427, 1.442695
      %v1461 = vpow.pop %v1460
      %v1462 = vmul.f32 %v1428, 1.442695
      %v1463 = vpow.pop %v1462
      %v1464 = vmul.f32 %v1429, 1.442695
      %v1465 = vpow.pop %v1464
      %v1466 = vmul.f32 %v1430, 1.442695
      %v1467 = vpow.pop %v1466
      %v1468 = vmul.f32 %v1431, 1.442695
      %v1469 = vpow.pop %v1468
      %v1470 = vmul.f32 %v1432, 1.442695
      %v1471 = vpow.pop %v1470
      %v1472 = vmul.f32 %v1433, 1.442695
      %v1473 = vpow.pop %v1472
      %v1474 = vmul.f32 %v1434, 1.442695
      %v1475 = vpow.pop %v1474
      %v1476 = vmul.f32 %v1435, 1.442695
      %v1477 = vpow.pop %v1476
      %v1478 = vmul.f32 %v1436, 1.442695
      %v1479 = vpow.pop %v1478
      %v1480 = vmul.f32 %v1437, 1.442695
      %v1481 = vpow.pop %v1480
      %v1482 = vmul.f32 %v1438, 1.442695
      %v1483 = vpow.pop %v1482
      %v1484 = vmul.f32 %v1439, 1.442695
      %v1485 = vpow.pop %v1484
      %v1486 = vmul.f32 %v1440, 1.442695
      %v1487 = vpow.pop %v1486
      %v1488 = vmul.f32 %v1441, 1.442695
      %v1489 = vpow.pop %v1488
      %v1490 = vmul.f32 %v1442, 1.442695
      %v1491 = vpow.pop %v1490
      %v1492 = vmul.f32 %v1443, 1.442695
      %v1493 = vpow.pop %v1492
      %v1494 = vmul.f32 %v1444, 1.442695
      %v1495 = vpow.pop %v1494
      %v1496 = vmul.f32 %v1445, 1.442695
      %v1497 = vpow.pop %v1496
      %v1498 = vmul.f32 %v1446, 1.442695
      %v1499 = vpow.pop %v1498
      %v1500 = vmul.f32 %v1447, 1.442695
      %v1501 = vpow.pop %v1500
      %v1502 = vmul.f32 %v1448, 1.442695
      %v1503 = vpow.pop %v1502
      %v1504 = vmul.f32 %v1449, 1.442695
      %v1505 = vpow.pop %v1504
      %v1506 = vmul.f32 %v1450, 1.442695
      %v1507 = vpow.pop %v1506
      %v1508 = vmul.f32 %v1451, 1.442695
      %v1509 = vpow.pop %v1508
      %v1510 = vmul.f32 %v1452, 1.442695
      %v1511 = vpow.pop %v1510
      %v1512 = vmul.f32 %v1453, 1.442695
      %v1513 = vpow.pop %v1512
      %v1514 = vmul.f32 %v1454, 1.442695
      %v1515 = vpow.pop %v1514
      %v1516 = vmul.f32 %v1455, 1.442695
      %v1517 = vpow.pop %v1516
      %v1518 = vmul.f32 %v1456, 1.442695
      %v1519 = vpow.pop %v1518
      %v1520 = vmul.f32 %v1457, 1.442695
      %v1521 = vpow.pop %v1520
      %v1522 = vsel %vm959, %v1459, 0.0
      %1523 = vadd.xlane.f32.xlu0 %v1522
      %v1524 = vpop.xlane.xlu0 %1523
      %v1525 = vsel %vm959, %v1461, 0.0
      %1526 = vadd.xlane.f32.xlu0 %v1525
      %v1527 = vpop.xlane.xlu0 %1526
      %v1528 = vsel %vm959, %v1463, 0.0
      %1529 = vadd.xlane.f32.xlu0 %v1528
      %v1530 = vpop.xlane.xlu0 %1529
      %v1531 = vsel %vm959, %v1465, 0.0
      %1532 = vadd.xlane.f32.xlu0 %v1531
      %v1533 = vpop.xlane.xlu0 %1532
      %v1534 = vsel %vm959, %v1467, 0.0
      %1535 = vadd.xlane.f32.xlu0 %v1534
      %v1536 = vpop.xlane.xlu0 %1535
      %v1537 = vsel %vm959, %v1469, 0.0
      %1538 = vadd.xlane.f32.xlu0 %v1537
      %v1539 = vpop.xlane.xlu0 %1538
      %v1540 = vsel %vm959, %v1471, 0.0
      %1541 = vadd.xlane.f32.xlu0 %v1540
      %v1542 = vpop.xlane.xlu0 %1541
      %v1543 = vsel %vm959, %v1473, 0.0
      %1544 = vadd.xlane.f32.xlu0 %v1543
      %v1545 = vpop.xlane.xlu0 %1544
      %v1546 = vsel %vm959, %v1475, 0.0
      %1547 = vadd.xlane.f32.xlu0 %v1546
      %v1548 = vpop.xlane.xlu0 %1547
      %v1549 = vsel %vm959, %v1477, 0.0
      %1550 = vadd.xlane.f32.xlu0 %v1549
      %v1551 = vpop.xlane.xlu0 %1550
      %v1552 = vsel %vm959, %v1479, 0.0
      %1553 = vadd.xlane.f32.xlu0 %v1552
      %v1554 = vpop.xlane.xlu0 %1553
      %v1555 = vsel %vm959, %v1481, 0.0
      %1556 = vadd.xlane.f32.xlu0 %v1555
      %v1557 = vpop.xlane.xlu0 %1556
      %v1558 = vsel %vm959, %v1483, 0.0
      %1559 = vadd.xlane.f32.xlu0 %v1558
      %v1560 = vpop.xlane.xlu0 %1559
      %v1561 = vsel %vm959, %v1485, 0.0
      %1562 = vadd.xlane.f32.xlu0 %v1561
      %v1563 = vpop.xlane.xlu0 %1562
      %v1564 = vsel %vm959, %v1487, 0.0
      %1565 = vadd.xlane.f32.xlu0 %v1564
      %v1566 = vpop.xlane.xlu0 %1565
      %v1567 = vsel %vm959, %v1489, 0.0
      %1568 = vadd.xlane.f32.xlu0 %v1567
      %v1569 = vpop.xlane.xlu0 %1568
      %v1570 = vsel %vm959, %v1491, 0.0
      %1571 = vadd.xlane.f32.xlu0 %v1570
      %v1572 = vpop.xlane.xlu0 %1571
      %v1573 = vsel %vm959, %v1493, 0.0
      %1574 = vadd.xlane.f32.xlu0 %v1573
      %v1575 = vpop.xlane.xlu0 %1574
      %v1576 = vsel %vm959, %v1495, 0.0
      %1577 = vadd.xlane.f32.xlu0 %v1576
      %v1578 = vpop.xlane.xlu0 %1577
      %v1579 = vsel %vm959, %v1497, 0.0
      %1580 = vadd.xlane.f32.xlu0 %v1579
      %v1581 = vpop.xlane.xlu0 %1580
      %v1582 = vsel %vm959, %v1499, 0.0
      %1583 = vadd.xlane.f32.xlu0 %v1582
      %v1584 = vpop.xlane.xlu0 %1583
      %v1585 = vsel %vm959, %v1501, 0.0
      %1586 = vadd.xlane.f32.xlu0 %v1585
      %v1587 = vpop.xlane.xlu0 %1586
      %v1588 = vsel %vm959, %v1503, 0.0
      %1589 = vadd.xlane.f32.xlu0 %v1588
      %v1590 = vpop.xlane.xlu0 %1589
      %v1591 = vsel %vm959, %v1505, 0.0
      %1592 = vadd.xlane.f32.xlu0 %v1591
      %v1593 = vpop.xlane.xlu0 %1592
      %v1594 = vsel %vm959, %v1507, 0.0
      %1595 = vadd.xlane.f32.xlu0 %v1594
      %v1596 = vpop.xlane.xlu0 %1595
      %v1597 = vsel %vm959, %v1509, 0.0
      %1598 = vadd.xlane.f32.xlu0 %v1597
      %v1599 = vpop.xlane.xlu0 %1598
      %v1600 = vsel %vm959, %v1511, 0.0
      %1601 = vadd.xlane.f32.xlu0 %v1600
      %v1602 = vpop.xlane.xlu0 %1601
      %v1603 = vsel %vm959, %v1513, 0.0
      %1604 = vadd.xlane.f32.xlu0 %v1603
      %v1605 = vpop.xlane.xlu0 %1604
      %v1606 = vsel %vm959, %v1515, 0.0
      %1607 = vadd.xlane.f32.xlu0 %v1606
      %v1608 = vpop.xlane.xlu0 %1607
      %v1609 = vsel %vm959, %v1517, 0.0
      %1610 = vadd.xlane.f32.xlu0 %v1609
      %v1611 = vpop.xlane.xlu0 %1610
      %v1612 = vsel %vm959, %v1519, 0.0
      %1613 = vadd.xlane.f32.xlu0 %v1612
      %v1614 = vpop.xlane.xlu0 %1613
      %v1615 = vsel %vm959, %v1521, 0.0
      %1616 = vadd.xlane.f32.xlu0 %v1615
      %v1617 = vpop.xlane.xlu0 %1616
      %v1618 = vrcp.pop %v1524
      %v1619 = vrcp.pop %v1527
      %v1620 = vrcp.pop %v1530
      %v1621 = vrcp.pop %v1533
      %v1622 = vrcp.pop %v1536
      %v1623 = vrcp.pop %v1539
      %v1624 = vrcp.pop %v1542
      %v1625 = vrcp.pop %v1545
      %v1626 = vrcp.pop %v1548
      %v1627 = vrcp.pop %v1551
      %v1628 = vrcp.pop %v1554
      %v1629 = vrcp.pop %v1557
      %v1630 = vrcp.pop %v1560
      %v1631 = vrcp.pop %v1563
      %v1632 = vrcp.pop %v1566
      %v1633 = vrcp.pop %v1569
      %v1634 = vrcp.pop %v1572
      %v1635 = vrcp.pop %v1575
      %v1636 = vrcp.pop %v1578
      %v1637 = vrcp.pop %v1581
      %v1638 = vrcp.pop %v1584
      %v1639 = vrcp.pop %v1587
      %v1640 = vrcp.pop %v1590
      %v1641 = vrcp.pop %v1593
      %v1642 = vrcp.pop %v1596
      %v1643 = vrcp.pop %v1599
      %v1644 = vrcp.pop %v1602
      %v1645 = vrcp.pop %v1605
      %v1646 = vrcp.pop %v1608
      %v1647 = vrcp.pop %v1611
      %v1648 = vrcp.pop %v1614
      %v1649 = vrcp.pop %v1617
      %v1650 = vmul.f32 %v1459, %v1618
      %v1651 = vmul.f32 %v1461, %v1619
      %v1652 = vmul.f32 %v1463, %v1620
      %v1653 = vmul.f32 %v1465, %v1621
      %v1654 = vmul.f32 %v1467, %v1622
      %v1655 = vmul.f32 %v1469, %v1623
      %v1656 = vmul.f32 %v1471, %v1624
      %v1657 = vmul.f32 %v1473, %v1625
      %v1658 = vmul.f32 %v1475, %v1626
      %v1659 = vmul.f32 %v1477, %v1627
      %v1660 = vmul.f32 %v1479, %v1628
      %v1661 = vmul.f32 %v1481, %v1629
      %v1662 = vmul.f32 %v1483, %v1630
      %v1663 = vmul.f32 %v1485, %v1631
      %v1664 = vmul.f32 %v1487, %v1632
      %v1665 = vmul.f32 %v1489, %v1633
      %v1666 = vmul.f32 %v1491, %v1634
      %v1667 = vmul.f32 %v1493, %v1635
      %v1668 = vmul.f32 %v1495, %v1636
      %v1669 = vmul.f32 %v1497, %v1637
      %v1670 = vmul.f32 %v1499, %v1638
      %v1671 = vmul.f32 %v1501, %v1639
      %v1672 = vmul.f32 %v1503, %v1640
      %v1673 = vmul.f32 %v1505, %v1641
      %v1674 = vmul.f32 %v1507, %v1642
      %v1675 = vmul.f32 %v1509, %v1643
      %v1676 = vmul.f32 %v1511, %v1644
      %v1677 = vmul.f32 %v1513, %v1645
      %v1678 = vmul.f32 %v1515, %v1646
      %v1679 = vmul.f32 %v1517, %v1647
      %v1680 = vmul.f32 %v1519, %v1648
      %v1681 = vmul.f32 %v1521, %v1649
      %v1682 = vpack.c.bf16 %v1651, %v1650
      %v1683 = vpack.c.bf16 %v1653, %v1652
      %v1684 = vpack.c.bf16 %v1655, %v1654
      %v1685 = vpack.c.bf16 %v1657, %v1656
      %v1686 = vpack.c.bf16 %v1659, %v1658
      %v1687 = vpack.c.bf16 %v1661, %v1660
      %v1688 = vpack.c.bf16 %v1663, %v1662
      %v1689 = vpack.c.bf16 %v1665, %v1664
      %v1690 = vpack.c.bf16 %v1667, %v1666
      %v1691 = vpack.c.bf16 %v1669, %v1668
      %v1692 = vpack.c.bf16 %v1671, %v1670
      %v1693 = vpack.c.bf16 %v1673, %v1672
      %v1694 = vpack.c.bf16 %v1675, %v1674
      %v1695 = vpack.c.bf16 %v1677, %v1676
      %v1696 = vpack.c.bf16 %v1679, %v1678
      %v1697 = vpack.c.bf16 %v1681, %v1680
      %v1714 = vunpack.c.l.b16 %v1682
      %v1715 = vunpack.c.h.b16 %v1682
      %v1716 = vunpack.c.l.b16 %v1683
      %v1717 = vunpack.c.h.b16 %v1683
      %v1718 = vunpack.c.l.b16 %v1684
      %v1719 = vunpack.c.h.b16 %v1684
      %v1720 = vunpack.c.l.b16 %v1685
      %v1721 = vunpack.c.h.b16 %v1685
      %v1722 = vunpack.c.l.b16 %v1686
      %v1723 = vunpack.c.h.b16 %v1686
      %v1724 = vunpack.c.l.b16 %v1687
      %v1725 = vunpack.c.h.b16 %v1687
      %v1726 = vunpack.c.l.b16 %v1688
      %v1727 = vunpack.c.h.b16 %v1688
      %v1728 = vunpack.c.l.b16 %v1689
      %v1729 = vunpack.c.h.b16 %v1689
      %v1730 = vunpack.c.l.b16 %v1690
      %v1731 = vunpack.c.h.b16 %v1690
      %v1732 = vunpack.c.l.b16 %v1691
      %v1733 = vunpack.c.h.b16 %v1691
      %v1734 = vunpack.c.l.b16 %v1692
      %v1735 = vunpack.c.h.b16 %v1692
      %v1736 = vunpack.c.l.b16 %v1693
      %v1737 = vunpack.c.h.b16 %v1693
      %v1738 = vunpack.c.l.b16 %v1694
      %v1739 = vunpack.c.h.b16 %v1694
      %v1740 = vunpack.c.l.b16 %v1695
      %v1741 = vunpack.c.h.b16 %v1695
      %v1742 = vunpack.c.l.b16 %v1696
      %v1743 = vunpack.c.h.b16 %v1696
      %v1744 = vunpack.c.l.b16 %v1697
      %v1745 = vunpack.c.h.b16 %v1697
      %v1746 = vpack.c.b16 %v1714, %v1714
      %v1747 = vpack.c.b16 %v1715, %v1715
      %v1748 = vpack.c.b16 %v1716, %v1716
      %v1749 = vpack.c.b16 %v1717, %v1717
      %v1750 = vpack.c.b16 %v1718, %v1718
      %v1751 = vpack.c.b16 %v1719, %v1719
      %v1752 = vpack.c.b16 %v1720, %v1720
      %v1753 = vpack.c.b16 %v1721, %v1721
      %v1754 = vpack.c.b16 %v1722, %v1722
      %v1755 = vpack.c.b16 %v1723, %v1723
      %v1756 = vpack.c.b16 %v1724, %v1724
      %v1757 = vpack.c.b16 %v1725, %v1725
      %v1758 = vpack.c.b16 %v1726, %v1726
      %v1759 = vpack.c.b16 %v1727, %v1727
      %v1760 = vpack.c.b16 %v1728, %v1728
      %v1761 = vpack.c.b16 %v1729, %v1729
      %v1762 = vpack.c.b16 %v1730, %v1730
      %v1763 = vpack.c.b16 %v1731, %v1731
      %v1764 = vpack.c.b16 %v1732, %v1732
      %v1765 = vpack.c.b16 %v1733, %v1733
      %v1766 = vpack.c.b16 %v1734, %v1734
      %v1767 = vpack.c.b16 %v1735, %v1735
      %v1768 = vpack.c.b16 %v1736, %v1736
      %v1769 = vpack.c.b16 %v1737, %v1737
      %v1770 = vpack.c.b16 %v1738, %v1738
      %v1771 = vpack.c.b16 %v1739, %v1739
      %v1772 = vpack.c.b16 %v1740, %v1740
      %v1773 = vpack.c.b16 %v1741, %v1741
      %v1774 = vpack.c.b16 %v1742, %v1742
      %v1775 = vpack.c.b16 %v1743, %v1743
      %v1776 = vpack.c.b16 %v1744, %v1744
      %v1777 = vpack.c.b16 %v1745, %v1745
      %1810 = vst.msk [vmem:[%s362] sm:$0xf] %vm1297, %v1746
      %1811 = vst.msk [vmem:[%s362 + $0x4] sm:$0xf] %vm1297, %v1747
      %1812 = vst.msk [vmem:[%s362 + $0x8] sm:$0xf] %vm1297, %v1748
      %1813 = vst.msk [vmem:[%s362 + $0xc] sm:$0xf] %vm1297, %v1749
      %1814 = vst.msk [vmem:[%s362 + $0x10] sm:$0xf] %vm1297, %v1750
      %1815 = vst.msk [vmem:[%s362 + $0x14] sm:$0xf] %vm1297, %v1751
      %1816 = vst.msk [vmem:[%s362 + $0x18] sm:$0xf] %vm1297, %v1752
      %1817 = vst.msk [vmem:[%s362 + $0x1c] sm:$0xf] %vm1297, %v1753
      %1818 = vst.msk [vmem:[%s362 + $0x20] sm:$0xf] %vm1297, %v1754
      %1819 = vst.msk [vmem:[%s362 + $0x24] sm:$0xf] %vm1297, %v1755
      %1820 = vst.msk [vmem:[%s362 + $0x28] sm:$0xf] %vm1297, %v1756
      %1821 = vst.msk [vmem:[%s362 + $0x2c] sm:$0xf] %vm1297, %v1757
      %1822 = vst.msk [vmem:[%s362 + $0x30] sm:$0xf] %vm1297, %v1758
      %1823 = vst.msk [vmem:[%s362 + $0x34] sm:$0xf] %vm1297, %v1759
      %1824 = vst.msk [vmem:[%s362 + $0x38] sm:$0xf] %vm1297, %v1760
      %1825 = vst.msk [vmem:[%s362 + $0x3c] sm:$0xf] %vm1297, %v1761
      %1826 = vst.msk [vmem:[%s362 + $0x40] sm:$0xf] %vm1297, %v1762
      %1827 = vst.msk [vmem:[%s362 + $0x44] sm:$0xf] %vm1297, %v1763
      %1828 = vst.msk [vmem:[%s362 + $0x48] sm:$0xf] %vm1297, %v1764
      %1829 = vst.msk [vmem:[%s362 + $0x4c] sm:$0xf] %vm1297, %v1765
      %1830 = vst.msk [vmem:[%s362 + $0x50] sm:$0xf] %vm1297, %v1766
      %1831 = vst.msk [vmem:[%s362 + $0x54] sm:$0xf] %vm1297, %v1767
      %1832 = vst.msk [vmem:[%s362 + $0x58] sm:$0xf] %vm1297, %v1768
      %1833 = vst.msk [vmem:[%s362 + $0x5c] sm:$0xf] %vm1297, %v1769
      %1834 = vst.msk [vmem:[%s362 + $0x60] sm:$0xf] %vm1297, %v1770
      %1835 = vst.msk [vmem:[%s362 + $0x64] sm:$0xf] %vm1297, %v1771
      %1836 = vst.msk [vmem:[%s362 + $0x68] sm:$0xf] %vm1297, %v1772
      %1837 = vst.msk [vmem:[%s362 + $0x6c] sm:$0xf] %vm1297, %v1773
      %1838 = vst.msk [vmem:[%s362 + $0x70] sm:$0xf] %vm1297, %v1774
      %1839 = vst.msk [vmem:[%s362 + $0x74] sm:$0xf] %vm1297, %v1775
      %1840 = vst.msk [vmem:[%s362 + $0x78] sm:$0xf] %vm1297, %v1776
      %1841 = vst.msk [vmem:[%s362 + $0x7c] sm:$0xf] %vm1297, %v1777
      %v1842 = vld [vmem:[%s5] sm:$0x1]
      %v1844 = vlaneseq
      %v1845 = vshrl.u32 %v1844, 7
      %v1846 = vsub.s32 0, %v1845
      %v1847 = vrot.slane %v1842, %v1846
      %v1849 = vmul.f32 %v1650, %v1847
      %v1850 = vmul.f32 %v1651, %v1847
      %v1851 = vmul.f32 %v1652, %v1847
      %v1852 = vmul.f32 %v1653, %v1847
      %v1853 = vmul.f32 %v1654, %v1847
      %v1854 = vmul.f32 %v1655, %v1847
      %v1855 = vmul.f32 %v1656, %v1847
      %v1856 = vmul.f32 %v1657, %v1847
      %v1857 = vmul.f32 %v1658, %v1847
      %v1858 = vmul.f32 %v1659, %v1847
      %v1859 = vmul.f32 %v1660, %v1847
      %v1860 = vmul.f32 %v1661, %v1847
      %v1861 = vmul.f32 %v1662, %v1847
      %v1862 = vmul.f32 %v1663, %v1847
      %v1863 = vmul.f32 %v1664, %v1847
      %v1864 = vmul.f32 %v1665, %v1847
      %v1865 = vmul.f32 %v1666, %v1847
      %v1866 = vmul.f32 %v1667, %v1847
      %v1867 = vmul.f32 %v1668, %v1847
      %v1868 = vmul.f32 %v1669, %v1847
      %v1869 = vmul.f32 %v1670, %v1847
      %v1870 = vmul.f32 %v1671, %v1847
      %v1871 = vmul.f32 %v1672, %v1847
      %v1872 = vmul.f32 %v1673, %v1847
      %v1873 = vmul.f32 %v1674, %v1847
      %v1874 = vmul.f32 %v1675, %v1847
      %v1875 = vmul.f32 %v1676, %v1847
      %v1876 = vmul.f32 %v1677, %v1847
      %v1877 = vmul.f32 %v1678, %v1847
      %v1878 = vmul.f32 %v1679, %v1847
      %v1879 = vmul.f32 %v1680, %v1847
      %v1880 = vmul.f32 %v1681, %v1847
      %v1881 = vsel %vm959, %v1849, 0.0
      %1882 = vadd.xlane.f32.xlu0 %v1881
      %v1883 = vpop.xlane.xlu0 %1882
      %v1884 = vsel %vm959, %v1850, 0.0
      %1885 = vadd.xlane.f32.xlu0 %v1884
      %v1886 = vpop.xlane.xlu0 %1885
      %v1887 = vsel %vm959, %v1851, 0.0
      %1888 = vadd.xlane.f32.xlu0 %v1887
      %v1889 = vpop.xlane.xlu0 %1888
      %v1890 = vsel %vm959, %v1852, 0.0
      %1891 = vadd.xlane.f32.xlu0 %v1890
      %v1892 = vpop.xlane.xlu0 %1891
      %v1893 = vsel %vm959, %v1853, 0.0
      %1894 = vadd.xlane.f32.xlu0 %v1893
      %v1895 = vpop.xlane.xlu0 %1894
      %v1896 = vsel %vm959, %v1854, 0.0
      %1897 = vadd.xlane.f32.xlu0 %v1896
      %v1898 = vpop.xlane.xlu0 %1897
      %v1899 = vsel %vm959, %v1855, 0.0
      %1900 = vadd.xlane.f32.xlu0 %v1899
      %v1901 = vpop.xlane.xlu0 %1900
      %v1902 = vsel %vm959, %v1856, 0.0
      %1903 = vadd.xlane.f32.xlu0 %v1902
      %v1904 = vpop.xlane.xlu0 %1903
      %v1905 = vsel %vm959, %v1857, 0.0
      %1906 = vadd.xlane.f32.xlu0 %v1905
      %v1907 = vpop.xlane.xlu0 %1906
      %v1908 = vsel %vm959, %v1858, 0.0
      %1909 = vadd.xlane.f32.xlu0 %v1908
      %v1910 = vpop.xlane.xlu0 %1909
      %v1911 = vsel %vm959, %v1859, 0.0
      %1912 = vadd.xlane.f32.xlu0 %v1911
      %v1913 = vpop.xlane.xlu0 %1912
      %v1914 = vsel %vm959, %v1860, 0.0
      %1915 = vadd.xlane.f32.xlu0 %v1914
      %v1916 = vpop.xlane.xlu0 %1915
      %v1917 = vsel %vm959, %v1861, 0.0
      %1918 = vadd.xlane.f32.xlu0 %v1917
      %v1919 = vpop.xlane.xlu0 %1918
      %v1920 = vsel %vm959, %v1862, 0.0
      %1921 = vadd.xlane.f32.xlu0 %v1920
      %v1922 = vpop.xlane.xlu0 %1921
      %v1923 = vsel %vm959, %v1863, 0.0
      %1924 = vadd.xlane.f32.xlu0 %v1923
      %v1925 = vpop.xlane.xlu0 %1924
      %v1926 = vsel %vm959, %v1864, 0.0
      %1927 = vadd.xlane.f32.xlu0 %v1926
      %v1928 = vpop.xlane.xlu0 %1927
      %v1929 = vsel %vm959, %v1865, 0.0
      %1930 = vadd.xlane.f32.xlu0 %v1929
      %v1931 = vpop.xlane.xlu0 %1930
      %v1932 = vsel %vm959, %v1866, 0.0
      %1933 = vadd.xlane.f32.xlu0 %v1932
      %v1934 = vpop.xlane.xlu0 %1933
      %v1935 = vsel %vm959, %v1867, 0.0
      %1936 = vadd.xlane.f32.xlu0 %v1935
      %v1937 = vpop.xlane.xlu0 %1936
      %v1938 = vsel %vm959, %v1868, 0.0
      %1939 = vadd.xlane.f32.xlu0 %v1938
      %v1940 = vpop.xlane.xlu0 %1939
      %v1941 = vsel %vm959, %v1869, 0.0
      %1942 = vadd.xlane.f32.xlu0 %v1941
      %v1943 = vpop.xlane.xlu0 %1942
      %v1944 = vsel %vm959, %v1870, 0.0
      %1945 = vadd.xlane.f32.xlu0 %v1944
      %v1946 = vpop.xlane.xlu0 %1945
      %v1947 = vsel %vm959, %v1871, 0.0
      %1948 = vadd.xlane.f32.xlu0 %v1947
      %v1949 = vpop.xlane.xlu0 %1948
      %v1950 = vsel %vm959, %v1872, 0.0
      %1951 = vadd.xlane.f32.xlu0 %v1950
      %v1952 = vpop.xlane.xlu0 %1951
      %v1953 = vsel %vm959, %v1873, 0.0
      %1954 = vadd.xlane.f32.xlu0 %v1953
      %v1955 = vpop.xlane.xlu0 %1954
      %v1956 = vsel %vm959, %v1874, 0.0
      %1957 = vadd.xlane.f32.xlu0 %v1956
      %v1958 = vpop.xlane.xlu0 %1957
      %v1959 = vsel %vm959, %v1875, 0.0
      %1960 = vadd.xlane.f32.xlu0 %v1959
      %v1961 = vpop.xlane.xlu0 %1960
      %v1962 = vsel %vm959, %v1876, 0.0
      %1963 = vadd.xlane.f32.xlu0 %v1962
      %v1964 = vpop.xlane.xlu0 %1963
      %v1965 = vsel %vm959, %v1877, 0.0
      %1966 = vadd.xlane.f32.xlu0 %v1965
      %v1967 = vpop.xlane.xlu0 %1966
      %v1968 = vsel %vm959, %v1878, 0.0
      %1969 = vadd.xlane.f32.xlu0 %v1968
      %v1970 = vpop.xlane.xlu0 %1969
      %v1971 = vsel %vm959, %v1879, 0.0
      %1972 = vadd.xlane.f32.xlu0 %v1971
      %v1973 = vpop.xlane.xlu0 %1972
      %v1974 = vsel %vm959, %v1880, 0.0
      %1975 = vadd.xlane.f32.xlu0 %v1974
      %v1976 = vpop.xlane.xlu0 %1975
      %vm1977 = vcmask 7168
      %1978 = vst.msk [vmem:[%s368] sm:$0xff] %vm1977, %v1883
      %1979 = vst.msk [vmem:[%s368 + $0x8] sm:$0xff] %vm1977, %v1886
      %1980 = vst.msk [vmem:[%s368 + $0x10] sm:$0xff] %vm1977, %v1889
      %1981 = vst.msk [vmem:[%s368 + $0x18] sm:$0xff] %vm1977, %v1892
      %1982 = vst.msk [vmem:[%s368 + $0x20] sm:$0xff] %vm1977, %v1895
      %1983 = vst.msk [vmem:[%s368 + $0x28] sm:$0xff] %vm1977, %v1898
      %1984 = vst.msk [vmem:[%s368 + $0x30] sm:$0xff] %vm1977, %v1901
      %1985 = vst.msk [vmem:[%s368 + $0x38] sm:$0xff] %vm1977, %v1904
      %1986 = vst.msk [vmem:[%s368 + $0x40] sm:$0xff] %vm1977, %v1907
      %1987 = vst.msk [vmem:[%s368 + $0x48] sm:$0xff] %vm1977, %v1910
      %1988 = vst.msk [vmem:[%s368 + $0x50] sm:$0xff] %vm1977, %v1913
      %1989 = vst.msk [vmem:[%s368 + $0x58] sm:$0xff] %vm1977, %v1916
      %1990 = vst.msk [vmem:[%s368 + $0x60] sm:$0xff] %vm1977, %v1919
      %1991 = vst.msk [vmem:[%s368 + $0x68] sm:$0xff] %vm1977, %v1922
      %1992 = vst.msk [vmem:[%s368 + $0x70] sm:$0xff] %vm1977, %v1925
      %1993 = vst.msk [vmem:[%s368 + $0x78] sm:$0xff] %vm1977, %v1928
      %1994 = vst.msk [vmem:[%s368 + $0x80] sm:$0xff] %vm1977, %v1931
      %1995 = vst.msk [vmem:[%s368 + $0x88] sm:$0xff] %vm1977, %v1934
      %1996 = vst.msk [vmem:[%s368 + $0x90] sm:$0xff] %vm1977, %v1937
      %1997 = vst.msk [vmem:[%s368 + $0x98] sm:$0xff] %vm1977, %v1940
      %1998 = vst.msk [vmem:[%s368 + $0xa0] sm:$0xff] %vm1977, %v1943
      %1999 = vst.msk [vmem:[%s368 + $0xa8] sm:$0xff] %vm1977, %v1946
      %2000 = vst.msk [vmem:[%s368 + $0xb0] sm:$0xff] %vm1977, %v1949
      %2001 = vst.msk [vmem:[%s368 + $0xb8] sm:$0xff] %vm1977, %v1952
      %2002 = vst.msk [vmem:[%s368 + $0xc0] sm:$0xff] %vm1977, %v1955
      %2003 = vst.msk [vmem:[%s368 + $0xc8] sm:$0xff] %vm1977, %v1958
      %2004 = vst.msk [vmem:[%s368 + $0xd0] sm:$0xff] %vm1977, %v1961
      %2005 = vst.msk [vmem:[%s368 + $0xd8] sm:$0xff] %vm1977, %v1964
      %2006 = vst.msk [vmem:[%s368 + $0xe0] sm:$0xff] %vm1977, %v1967
      %2007 = vst.msk [vmem:[%s368 + $0xe8] sm:$0xff] %vm1977, %v1970
      %2008 = vst.msk [vmem:[%s368 + $0xf0] sm:$0xff] %vm1977, %v1973
      %2009 = vst.msk [vmem:[%s368 + $0xf8] sm:$0xff] %vm1977, %v1976
      %v2010 = vrcp.pop %v1883
      %v2011 = vrcp.pop %v1886
      %v2012 = vrcp.pop %v1889
      %v2013 = vrcp.pop %v1892
      %v2014 = vrcp.pop %v1895
      %v2015 = vrcp.pop %v1898
      %v2016 = vrcp.pop %v1901
      %v2017 = vrcp.pop %v1904
      %v2018 = vrcp.pop %v1907
      %v2019 = vrcp.pop %v1910
      %v2020 = vrcp.pop %v1913
      %v2021 = vrcp.pop %v1916
      %v2022 = vrcp.pop %v1919
      %v2023 = vrcp.pop %v1922
      %v2024 = vrcp.pop %v1925
      %v2025 = vrcp.pop %v1928
      %v2026 = vrcp.pop %v1931
      %v2027 = vrcp.pop %v1934
      %v2028 = vrcp.pop %v1937
      %v2029 = vrcp.pop %v1940
      %v2030 = vrcp.pop %v1943
      %v2031 = vrcp.pop %v1946
      %v2032 = vrcp.pop %v1949
      %v2033 = vrcp.pop %v1952
      %v2034 = vrcp.pop %v1955
      %v2035 = vrcp.pop %v1958
      %v2036 = vrcp.pop %v1961
      %v2037 = vrcp.pop %v1964
      %v2038 = vrcp.pop %v1967
      %v2039 = vrcp.pop %v1970
      %v2040 = vrcp.pop %v1973
      %v2041 = vrcp.pop %v1976
      %v2042 = vmul.f32 %v2010, 0.928
      %v2043 = vmul.f32 %v2011, 0.928
      %v2044 = vmul.f32 %v2012, 0.928
      %v2045 = vmul.f32 %v2013, 0.928
      %v2046 = vmul.f32 %v2014, 0.928
      %v2047 = vmul.f32 %v2015, 0.928
      %v2048 = vmul.f32 %v2016, 0.928
      %v2049 = vmul.f32 %v2017, 0.928
      %v2050 = vmul.f32 %v2018, 0.928
      %v2051 = vmul.f32 %v2019, 0.928
      %v2052 = vmul.f32 %v2020, 0.928
      %v2053 = vmul.f32 %v2021, 0.928
      %v2054 = vmul.f32 %v2022, 0.928
      %v2055 = vmul.f32 %v2023, 0.928
      %v2056 = vmul.f32 %v2024, 0.928
      %v2057 = vmul.f32 %v2025, 0.928
      %v2058 = vmul.f32 %v2026, 0.928
      %v2059 = vmul.f32 %v2027, 0.928
      %v2060 = vmul.f32 %v2028, 0.928
      %v2061 = vmul.f32 %v2029, 0.928
      %v2062 = vmul.f32 %v2030, 0.928
      %v2063 = vmul.f32 %v2031, 0.928
      %v2064 = vmul.f32 %v2032, 0.928
      %v2065 = vmul.f32 %v2033, 0.928
      %v2066 = vmul.f32 %v2034, 0.928
      %v2067 = vmul.f32 %v2035, 0.928
      %v2068 = vmul.f32 %v2036, 0.928
      %v2069 = vmul.f32 %v2037, 0.928
      %v2070 = vmul.f32 %v2038, 0.928
      %v2071 = vmul.f32 %v2039, 0.928
      %v2072 = vmul.f32 %v2040, 0.928
      %v2073 = vmul.f32 %v2041, 0.928
      %2074 = vst.msk [vmem:[%s374] sm:$0xff] %vm1977, %v2042
      %2075 = vst.msk [vmem:[%s374 + $0x8] sm:$0xff] %vm1977, %v2043
      %2076 = vst.msk [vmem:[%s374 + $0x10] sm:$0xff] %vm1977, %v2044
      %2077 = vst.msk [vmem:[%s374 + $0x18] sm:$0xff] %vm1977, %v2045
      %2078 = vst.msk [vmem:[%s374 + $0x20] sm:$0xff] %vm1977, %v2046
      %2079 = vst.msk [vmem:[%s374 + $0x28] sm:$0xff] %vm1977, %v2047
      %2080 = vst.msk [vmem:[%s374 + $0x30] sm:$0xff] %vm1977, %v2048
      %2081 = vst.msk [vmem:[%s374 + $0x38] sm:$0xff] %vm1977, %v2049
      %2082 = vst.msk [vmem:[%s374 + $0x40] sm:$0xff] %vm1977, %v2050
      %2083 = vst.msk [vmem:[%s374 + $0x48] sm:$0xff] %vm1977, %v2051
      %2084 = vst.msk [vmem:[%s374 + $0x50] sm:$0xff] %vm1977, %v2052
      %2085 = vst.msk [vmem:[%s374 + $0x58] sm:$0xff] %vm1977, %v2053
      %2086 = vst.msk [vmem:[%s374 + $0x60] sm:$0xff] %vm1977, %v2054
      %2087 = vst.msk [vmem:[%s374 + $0x68] sm:$0xff] %vm1977, %v2055
      %2088 = vst.msk [vmem:[%s374 + $0x70] sm:$0xff] %vm1977, %v2056
      %2089 = vst.msk [vmem:[%s374 + $0x78] sm:$0xff] %vm1977, %v2057
      %2090 = vst.msk [vmem:[%s374 + $0x80] sm:$0xff] %vm1977, %v2058
      %2091 = vst.msk [vmem:[%s374 + $0x88] sm:$0xff] %vm1977, %v2059
      %2092 = vst.msk [vmem:[%s374 + $0x90] sm:$0xff] %vm1977, %v2060
      %2093 = vst.msk [vmem:[%s374 + $0x98] sm:$0xff] %vm1977, %v2061
      %2094 = vst.msk [vmem:[%s374 + $0xa0] sm:$0xff] %vm1977, %v2062
      %2095 = vst.msk [vmem:[%s374 + $0xa8] sm:$0xff] %vm1977, %v2063
      %2096 = vst.msk [vmem:[%s374 + $0xb0] sm:$0xff] %vm1977, %v2064
      %2097 = vst.msk [vmem:[%s374 + $0xb8] sm:$0xff] %vm1977, %v2065
      %2098 = vst.msk [vmem:[%s374 + $0xc0] sm:$0xff] %vm1977, %v2066
      %2099 = vst.msk [vmem:[%s374 + $0xc8] sm:$0xff] %vm1977, %v2067
      %2100 = vst.msk [vmem:[%s374 + $0xd0] sm:$0xff] %vm1977, %v2068
      %2101 = vst.msk [vmem:[%s374 + $0xd8] sm:$0xff] %vm1977, %v2069
      %2102 = vst.msk [vmem:[%s374 + $0xe0] sm:$0xff] %vm1977, %v2070
      %2103 = vst.msk [vmem:[%s374 + $0xe8] sm:$0xff] %vm1977, %v2071
      %2104 = vst.msk [vmem:[%s374 + $0xf0] sm:$0xff] %vm1977, %v2072
      %2105 = vst.msk [vmem:[%s374 + $0xf8] sm:$0xff] %vm1977, %v2073
      %s2106 = smul.u32 32, %s21
      %p2107 = scmp.lt.s32.totalorder %s2106, 63
      %s2108 = scalar_select %p2107, %s2106, 63
      %s2109 = smul.addr %s2108, 4
      %s2110 = scalar_lea.vmem %s6, %s2109
      %s2111 = smul.u32 32, %s21
      %p2112 = scmp.lt.s32.totalorder %s2111, 63
      %s2113 = scalar_select %p2112, %s2111, 63
      %s2114 = smul.addr %s2113, 4
      %s2115 = scalar_lea.vmem %s7, %s2114
      %s2116 = smul.u32 32, %s21
      %p2117 = scmp.lt.s32.totalorder %s2116, 63
      %s2118 = scalar_select %p2117, %s2116, 63
      %s2119 = smul.addr %s2118, 8
      %s2120 = scalar_lea.vmem %s8, %s2119
      %s2121 = smul.u32 32, %s21
      %p2122 = scmp.lt.s32.totalorder %s2121, 63
      %s2123 = scalar_select %p2122, %s2121, 63
      %s2124 = smul.addr %s2123, 8
      %s2125 = scalar_lea.vmem %s9, %s2124
      // Predicated region
      $region45: #{tpu_custom_call.1} parent=43 // pred_check
        %p2126 = pneg %p170
      $region46: #{tpu_custom_call.1} parent=43 // pred_check_branch
        %2128 = sbr.rel (%p2126) target = $region48
      $region47: #{tpu_custom_call.1} parent=43 // pred_region
        %s2129 = smul.u32 32, %s21
      $region48: #{tpu_custom_call.1} parent=43 // pred_fallthru
        _
      // Predicated region
      $region49: #{tpu_custom_call.1} parent=43 // pred_check
        %p2130 = pneg %p196
      $region50: #{tpu_custom_call.1} parent=43 // pred_check_branch
        %2132 = sbr.rel (%p2130) target = $region52
      $region51: #{tpu_custom_call.1} parent=43 // pred_region
        %s2133 = smul.u32 32, %s21
      $region52: #{tpu_custom_call.1} parent=43 // pred_fallthru
        _
      // Predicated region
      $region53: #{tpu_custom_call.1} parent=43 // pred_check
        %p2134 = pneg %p222
      $region54: #{tpu_custom_call.1} parent=43 // pred_check_branch
        %2136 = sbr.rel (%p2134) target = $region56
      $region55: #{tpu_custom_call.1} parent=43 // pred_region
        %s2137 = smul.u32 32, %s21
      $region56: #{tpu_custom_call.1} parent=43 // pred_fallthru
        _
      // Predicated region
      $region57: #{tpu_custom_call.1} parent=43 // pred_check
        %p2138 = pneg %p248
      $region58: #{tpu_custom_call.1} parent=43 // pred_check_branch
        %2140 = sbr.rel (%p2138) target = $region60
      $region59: #{tpu_custom_call.1} parent=43 // pred_region
        %s2141 = smul.u32 32, %s21
      $region60: #{tpu_custom_call.1} parent=43 // pred_fallthru
        _
    $region44: #{tpu_custom_call.1} parent=5 // pred_fallthru
      _
    %p2142 = scmp.le.s32.totalorder 2, %s16
    // Predicated region
    $region61: #{tpu_custom_call.1} parent=5 // pred_check
      %p2143 = pneg %p2142
    $region62: #{tpu_custom_call.1} parent=5 // pred_check_branch
      %2145 = sbr.rel (%p2143) target = $region64
    $region63: #{tpu_custom_call.1} parent=5 // pred_region
      %s2146 = ssub.s32 %s16, 2
      // Predicated region
      $region65: #{tpu_custom_call.1} parent=63 // pred_check
        %p2147 = pneg %p176
      $region66: #{tpu_custom_call.1} parent=63 // pred_check_branch
        %2149 = sbr.rel (%p2147) target = $region68
      $region67: #{tpu_custom_call.1} parent=63 // pred_region
        %s2150 = smul.u32 32, %s22
        %p2151 = scmp.lt.s32.totalorder %s2150, 63
        %s2152 = scalar_select %p2151, %s2150, 63
        %s2153 = smul.addr %s2152, 4
        %s2154 = scalar_lea.vmem %s6, %s2153
      $region68: #{tpu_custom_call.1} parent=63 // pred_fallthru
        _
      // Predicated region
      $region69: #{tpu_custom_call.1} parent=63 // pred_check
        %p2155 = pneg %p202
      $region70: #{tpu_custom_call.1} parent=63 // pred_check_branch
        %2157 = sbr.rel (%p2155) target = $region72
      $region71: #{tpu_custom_call.1} parent=63 // pred_region
        %s2158 = smul.u32 32, %s22
        %p2159 = scmp.lt.s32.totalorder %s2158, 63
        %s2160 = scalar_select %p2159, %s2158, 63
        %s2161 = smul.addr %s2160, 4
        %s2162 = scalar_lea.vmem %s7, %s2161
      $region72: #{tpu_custom_call.1} parent=63 // pred_fallthru
        _
      // Predicated region
      $region73: #{tpu_custom_call.1} parent=63 // pred_check
        %p2163 = pneg %p228
      $region74: #{tpu_custom_call.1} parent=63 // pred_check_branch
        %2165 = sbr.rel (%p2163) target = $region76
      $region75: #{tpu_custom_call.1} parent=63 // pred_region
        %s2166 = smul.u32 32, %s22
        %p2167 = scmp.lt.s32.totalorder %s2166, 63
        %s2168 = scalar_select %p2167, %s2166, 63
        %s2169 = smul.addr %s2168, 8
        %s2170 = scalar_lea.vmem %s8, %s2169
      $region76: #{tpu_custom_call.1} parent=63 // pred_fallthru
        _
      // Predicated region
      $region77: #{tpu_custom_call.1} parent=63 // pred_check
        %p2171 = pneg %p254
      $region78: #{tpu_custom_call.1} parent=63 // pred_check_branch
        %2173 = sbr.rel (%p2171) target = $region80
      $region79: #{tpu_custom_call.1} parent=63 // pred_region
        %s2174 = smul.u32 32, %s22
        %p2175 = scmp.lt.s32.totalorder %s2174, 63
        %s2176 = scalar_select %p2175, %s2174, 63
        %s2177 = smul.addr %s2176, 8
        %s2178 = scalar_lea.vmem %s9, %s2177
      $region80: #{tpu_custom_call.1} parent=63 // pred_fallthru
        _
    $region64: #{tpu_custom_call.1} parent=5 // pred_fallthru
      _
  $region6: #{tpu_custom_call.1} parent=0 // loop_footer
    %s20 = sadd.s32 1, %s16
  $region7: #{tpu_custom_call.1} parent=0 // loop_footer_branch
    %15 = sbr.rel target = $region3
  $region8: #{tpu_custom_call.1} parent=0 // loop_exit
    _

</llo_original>
